<compile_context>
chip_gen: v5e
topology: v5e:2x2
jax: 0.10.0
libtpu: 0.0.40
codegen_flags: <defaults>
</compile_context>

<pallas_src>
import functools

import jax
import jax.numpy as jnp
from jax.experimental import pallas as pl
from jax.experimental.pallas import tpu as pltpu


def _conv_block_kernel(x_ref, w1_ref, b1_ref, w2_ref, b2_ref, mask_ref,
                       o_ref, patch1_ref, patch2_ref, *, H, W, use_pn):
    """Fused ConvBlock for one batch element, channels-first flat layout.

    x_ref     : (Cin, Ppad) bf16   width-padded input rows, flattened and
                                   zero-extended to Ppad lanes (multiple of 128)
    w1_ref    : (Cout, 9*Cin) bf16 scale-folded conv1 weight (im2col layout)
    b1_ref    : (Cout, 1) f32
    w2_ref    : (Cout, 9*Cout) bf16
    b2_ref    : (Cout, 1) f32
    mask_ref  : (1, Ppad) f32      1.0 at interior padded-grid positions, 0.0
                                   on the pad ring and the lane-alignment tail
    o_ref     : (Cout, H*W) f32    dense output (ring stripped in-kernel)
    patch*_ref: VMEM im2col scratch (bf16 when channels are 16-aligned)
    """
    row = W + 2
    Ppad = x_ref.shape[-1]
    mxu_dtype = jnp.bfloat16

    def build_patch(patch_ref, src, base_shift):
        # patch[k*C + c, p] = src[c, (p + off_k - base_shift) mod Ppad].
        # Every 3x3 tap on the flattened padded grid is a uniform lane roll;
        # wrapped positions only feed pad-ring / lane-tail outputs, which are
        # masked (stage 1) or never stored (stage 2).
        C = src.shape[0]
        src = src.astype(patch_ref.dtype)
        k = 0
        for dy in (-1, 0, 1):
            for dx in (-1, 0, 1):
                off = dy * row + dx
                shift = (base_shift - off) % Ppad
                rs = slice(k * C, (k + 1) * C)
                if shift == 0:
                    patch_ref[rs, :] = src
                else:
                    patch_ref[rs, :] = pltpu.roll(src, shift, axis=1)
                k += 1

    def epilogue(acc, b_ref):
        y = acc + b_ref[...]                       # bias
        y = jnp.where(y > 0.0, y, 0.2 * y)         # LeakyReLU(0.2)
        if use_pn:                                 # PixelNorm over channels
            ms = jnp.mean(y * y, axis=0, keepdims=True)
            y = y * jax.lax.rsqrt(ms + 1e-8)
        return y

    # ---- stage 1: WSConv2d (scale folded into w1) + LeakyReLU (+ PixelNorm)
    # base_shift=row aligns the width-padded input (which starts at padded-grid
    # row 1) with the padded grid; the top/bottom zero rows come from the roll
    # wrapping into the zero lane tail of x_ref.
    build_patch(patch1_ref, x_ref[...], base_shift=row)
    y = epilogue(
        jnp.dot(w1_ref[...], patch1_ref[...].astype(mxu_dtype),
                preferred_element_type=jnp.float32), b1_ref)

    # conv2's "same" padding expects exact zeros on the ring (and on the lane
    # tail), not bias/activation garbage -> mask them out.  All garbage values
    # are finite (they come from the zero-extended input slab), so 0*x == 0.
    y = y * mask_ref[...]

    # ---- stage 2 (input already lives on the padded grid -> base_shift=0)
    build_patch(patch2_ref, y, base_shift=0)
    z = epilogue(
        jnp.dot(w2_ref[...], patch2_ref[...].astype(mxu_dtype),
                preferred_element_type=jnp.float32), b2_ref)

    # ---- strip the pad ring in-kernel: dense (Cout, H*W) output, dense DMA.
    for r in range(H):
        src_lane = (r + 1) * row + 1
        o_ref[:, r * W:(r + 1) * W] = z[:, src_lane:src_lane + W].astype(o_ref.dtype)


def _pick_vmem_limit(footprint_bytes):
    """Scoped-VMEM request: footprint + headroom, capped by the part's VMEM."""
    try:
        cap = int(pltpu.get_tpu_info().vmem_capacity_bytes) * 3 // 4
    except Exception:
        cap = 48 * 1024 * 1024          # safe on v7x (64 MiB physical)
    want = max(32 * 1024 * 1024, 2 * int(footprint_bytes) + (8 << 20))
    return int(min(want, cap))


def conv_block_forward(x_nchw, params, *, use_pixelnorm=True):
    """ConvBlock forward. x_nchw: (B, Cin, H, W) -> (B, Cout, H, W)."""
    w1, b1, w2, b2 = params             # PyTorch layout: (Cout,Cin,3,3), (Cout,)
    B, Cin, H, W = x_nchw.shape
    Cout = w1.shape[0]
    row = W + 2
    P = (H + 2) * row
    Ppad = ((P + 127) // 128) * 128     # lane-align the flattened spatial axis
    HW = H * W

    scale1 = (2.0 / (Cin * 9)) ** 0.5
    scale2 = (2.0 / (Cout * 9)) ** 0.5

    # Fold WS scale into the weights (conv is linear), reorder to the im2col
    # (ky, kx, cin) K-axis layout, cast to bf16 for the MXU.
    w1m = (jnp.transpose(w1, (0, 2, 3, 1)) * scale1).reshape(Cout, 9 * Cin)
    w2m = (jnp.transpose(w2, (0, 2, 3, 1)) * scale2).reshape(Cout, 9 * Cout)
    w1m = w1m.astype(jnp.bfloat16)
    w2m = w2m.astype(jnp.bfloat16)
    b1c = b1.reshape(Cout, 1).astype(jnp.float32)
    b2c = b2.reshape(Cout, 1).astype(jnp.float32)

    # Width-only zero pad + bf16 cast + lane pad to Ppad: one fused XLA pass
    # (the bf16 cast pass is needed anyway to halve the input DMA).  No full
    # 2-D pad and no output slice pass -- both are folded into the kernel.
    x_w = jnp.pad(x_nchw, ((0, 0), (0, 0), (0, 0), (1, 1)))       # (B,Cin,H,W+2)
    x_flat = x_w.reshape(B, Cin, H * row).astype(jnp.bfloat16)
    x_flat = jnp.pad(x_flat, ((0, 0), (0, 0), (0, Ppad - H * row)))

    # Interior mask on the flattened padded grid (1 inside, 0 on pad ring and
    # on the lane-alignment tail).
    rr = jnp.arange(H + 2)
    cc = jnp.arange(W + 2)
    m2 = ((rr >= 1) & (rr <= H))[:, None] & ((cc >= 1) & (cc <= W))[None, :]
    mask = jnp.pad(m2.astype(jnp.float32).reshape(1, P),
                   ((0, 0), (0, Ppad - P)))

    # bf16 im2col scratch when channel counts are aligned to the packed-bf16
    # sublane tile (true for realistic ProGAN channels); f32 otherwise so the
    # per-tap sublane-offset stores stay trivially lowerable at tiny C.
    pdt1 = jnp.bfloat16 if Cin % 16 == 0 else jnp.float32
    pdt2 = jnp.bfloat16 if Cout % 16 == 0 else jnp.float32

    footprint = (
        2 * Cin * Ppad * 2                      # x block, double buffered, bf16
        + 2 * Ppad * 4                          # mask
        + 2 * Cout * HW * 4                     # out block, double buffered
        + 9 * Cin * Ppad * jnp.dtype(pdt1).itemsize
        + 9 * Cout * Ppad * jnp.dtype(pdt2).itemsize
        + 2 * 2 * (9 * Cin * Cout + 9 * Cout * Cout)   # bf16 weights
        + 4 * 4 * Cout)                         # biases

    kernel = functools.partial(_conv_block_kernel, H=H, W=W,
                               use_pn=use_pixelnorm)

    out_flat = pl.pallas_call(
        kernel,
        out_shape=jax.ShapeDtypeStruct((B, Cout, HW), jnp.float32),
        grid_spec=pltpu.PrefetchScalarGridSpec(
            num_scalar_prefetch=0,
            grid=(B,),
            in_specs=[
                pl.BlockSpec((None, Cin, Ppad), lambda b: (b, 0, 0)),
                pl.BlockSpec((Cout, 9 * Cin), lambda b: (0, 0)),
                pl.BlockSpec((Cout, 1), lambda b: (0, 0)),
                pl.BlockSpec((Cout, 9 * Cout), lambda b: (0, 0)),
                pl.BlockSpec((Cout, 1), lambda b: (0, 0)),
                pl.BlockSpec((1, Ppad), lambda b: (0, 0)),
            ],
            out_specs=pl.BlockSpec((None, Cout, HW), lambda b: (b, 0, 0)),
            scratch_shapes=[
                pltpu.VMEM((9 * Cin, Ppad), pdt1),    # im2col patch, stage 1
                pltpu.VMEM((9 * Cout, Ppad), pdt2),   # im2col patch, stage 2
            ],
        ),
        compiler_params=pltpu.CompilerParams(
            dimension_semantics=("parallel",),
            vmem_limit_bytes=_pick_vmem_limit(footprint),
        ),
    )(x_flat, w1m, b1c, w2m, b2c, mask)

    # Row-major compatible reshape only (no data movement): already NCHW, dense.
    return out_flat.reshape(B, Cout, H, W)


def _reference_forward(x_nchw, params, *, use_pixelnorm=True, operand_dtype=None):
    """Pure-JAX reference (lax.conv) matching the PyTorch module.

    operand_dtype=jnp.bfloat16 rounds x / weights / the inter-stage activation
    to bf16 (then back to f32), mirroring the kernel's MXU operand precision.
    """
    w1, b1, w2, b2 = params

    def rnd(a):
        if operand_dtype is None:
            return a
        return a.astype(operand_dtype).astype(jnp.float32)

    def ws_stage(x, w, b, scale):
        y = jax.lax.conv_general_dilated(
            rnd(x), rnd(w * scale), window_strides=(1, 1), padding="SAME",
            dimension_numbers=("NCHW", "OIHW", "NCHW"),
            precision=jax.lax.Precision.HIGHEST)
        y = y + b.reshape(1, -1, 1, 1)
        y = jnp.where(y > 0, y, 0.2 * y)
        if use_pixelnorm:
            ms = jnp.mean(y * y, axis=1, keepdims=True)
            y = y * jax.lax.rsqrt(ms + 1e-8)
        return y

    Cin, Cout = w1.shape[1], w1.shape[0]
    y = ws_stage(x_nchw, w1, b1, (2.0 / (Cin * 9)) ** 0.5)
    y = ws_stage(y, w2, b2, (2.0 / (Cout * 9)) ** 0.5)
    return y


def init_params(key, in_channels, out_channels):
    """Deterministic init mirroring WSConv2d: normal weights, zero bias."""
    k1, k2 = jax.random.split(key)
    w1 = jax.random.normal(k1, (out_channels, in_channels, 3, 3), jnp.float32)
    b1 = jnp.zeros((out_channels,), jnp.float32)
    w2 = jax.random.normal(k2, (out_channels, out_channels, 3, 3), jnp.float32)
    b2 = jnp.zeros((out_channels,), jnp.float32)
    return (w1, b1, w2, b2)


if __name__ == "__main__":
    key = jax.random.PRNGKey(0)
    kx, kp, kb1, kb2 = jax.random.split(key, 4)

    B, Cin, Cout, H, W = 2, 4, 8, 16, 16
    x = jax.random.normal(kx, (B, Cin, H, W), jnp.float32)

    def check(p, use_pn):
        fwd = jax.jit(lambda xx, pp: conv_block_forward(xx, pp,
                                                        use_pixelnorm=use_pn))
        out = jax.block_until_ready(fwd(x, p))
        assert out.shape == (B, Cout, H, W), out.shape
        # Tight check against a reference with bf16-rounded operands (same
        # precision the kernel feeds the MXU).
        ref_bf = _reference_forward(x, p, use_pixelnorm=use_pn,
                                    operand_dtype=jnp.bfloat16)
        tight = float(jnp.max(jnp.abs(out - ref_bf)))
        assert tight < 1e-2, tight
        # Loose sanity check against the full-f32 module reference (bf16 MXU
        # operands are an expected, small precision change).
        ref_f32 = _reference_forward(x, p, use_pixelnorm=use_pn)
        num = float(jnp.sqrt(jnp.sum((out - ref_f32) ** 2)))
        den = float(jnp.sqrt(jnp.sum(ref_f32 ** 2)))
        assert num / den < 3e-2, num / den

    # 1) module-faithful init (normal weights, zero bias) with PixelNorm
    params = init_params(kp, Cin, Cout)
    check(params, True)

    # 2) non-zero biases exercise the in-kernel zero-ring masking between stages
    w1, _, w2, _ = params
    params_nz = (w1, 0.5 * jax.random.normal(kb1, (Cout,), jnp.float32),
                 w2, 0.5 * jax.random.normal(kb2, (Cout,), jnp.float32))
    check(params_nz, True)

    # 3) use_pixelnorm=False path
    check(params_nz, False)

    print("KERNEL_OK")
</pallas_src>

<mosaic_0001>
module attributes {stable_mosaic.version = 11 : i64} {
  func.func @_conv_block_kernel(%arg0: i32, %arg1: memref<1x4x384xbf16, #tpu.memory_space<vmem>>, %arg2: memref<8x36xbf16, #tpu.memory_space<vmem>>, %arg3: memref<8x1xf32, #tpu.memory_space<vmem>>, %arg4: memref<8x72xbf16, #tpu.memory_space<vmem>>, %arg5: memref<8x1xf32, #tpu.memory_space<vmem>>, %arg6: memref<1x384xf32, #tpu.memory_space<vmem>>, %arg7: memref<1x8x256xf32, #tpu.memory_space<vmem>>, %arg8: memref<36x384xf32, #tpu.memory_space<vmem>>, %arg9: memref<72x384xf32, #tpu.memory_space<vmem>>) attributes {dimension_semantics = [#tpu.dimension_semantics<parallel>], iteration_bounds = array<i64: 2>, scalar_prefetch = 0 : i64, scratch_operands = 2 : i64, tpu.core_type = #tpu.core_type<tc>, window_params = [{transform_indices = @transform_0, window_bounds = array<i64: 1, 4, 384>}, {pipeline_mode = #tpu.pipeline_mode<synchronous>, transform_indices = @transform_1, window_bounds = array<i64: 8, 36>}, {pipeline_mode = #tpu.pipeline_mode<synchronous>, transform_indices = @transform_2, window_bounds = array<i64: 8, 1>}, {pipeline_mode = #tpu.pipeline_mode<synchronous>, transform_indices = @transform_3, window_bounds = array<i64: 8, 72>}, {pipeline_mode = #tpu.pipeline_mode<synchronous>, transform_indices = @transform_4, window_bounds = array<i64: 8, 1>}, {pipeline_mode = #tpu.pipeline_mode<synchronous>, transform_indices = @transform_5, window_bounds = array<i64: 1, 384>}, {transform_indices = @transform_6, window_bounds = array<i64: 1, 8, 256>}]} {
    %c0 = arith.constant 0 : index
    %c0_0 = arith.constant 0 : index
    %c0_1 = arith.constant 0 : index
    %0 = vector.load %arg1[%c0, %c0_0, %c0_1] : memref<1x4x384xbf16, #tpu.memory_space<vmem>>, vector<1x4x384xbf16>
    %1 = vector.shape_cast %0 : vector<1x4x384xbf16> to vector<4x384xbf16>
    %2 = arith.extf %1 : vector<4x384xbf16> to vector<4x384xf32>
    %c37_i32 = arith.constant 37 : i32
    %3 = tpu.dynamic_rotate %2 by %c37_i32 dim 1 : vector<4x384xf32>, i32 -> vector<4x384xf32>
    %c0_2 = arith.constant 0 : index
    %c0_3 = arith.constant 0 : index
    %4 = vector.load %arg8[%c0_2, %c0_3] : memref<36x384xf32, #tpu.memory_space<vmem>>, vector<4x384xf32>
    tpu.vector_store %arg8[%c0_2, %c0_3], %3 {strides = array<i32>} : memref<36x384xf32, #tpu.memory_space<vmem>>, vector<4x384xf32>,
    %c36_i32 = arith.constant 36 : i32
    %5 = tpu.dynamic_rotate %2 by %c36_i32 dim 1 : vector<4x384xf32>, i32 -> vector<4x384xf32>
    %c4 = arith.constant 4 : index
    %c0_4 = arith.constant 0 : index
    %6 = vector.load %arg8[%c4, %c0_4] : memref<36x384xf32, #tpu.memory_space<vmem>>, vector<4x384xf32>
    tpu.vector_store %arg8[%c4, %c0_4], %5 {strides = array<i32>} : memref<36x384xf32, #tpu.memory_space<vmem>>, vector<4x384xf32>,
    %c35_i32 = arith.constant 35 : i32
    %7 = tpu.dynamic_rotate %2 by %c35_i32 dim 1 : vector<4x384xf32>, i32 -> vector<4x384xf32>
    %c8 = arith.constant 8 : index
    %c0_5 = arith.constant 0 : index
    %8 = vector.load %arg8[%c8, %c0_5] : memref<36x384xf32, #tpu.memory_space<vmem>>, vector<4x384xf32>
    tpu.vector_store %arg8[%c8, %c0_5], %7 {strides = array<i32>} : memref<36x384xf32, #tpu.memory_space<vmem>>, vector<4x384xf32>,
    %c19_i32 = arith.constant 19 : i32
    %9 = tpu.dynamic_rotate %2 by %c19_i32 dim 1 : vector<4x384xf32>, i32 -> vector<4x384xf32>
    %c12 = arith.constant 12 : index
    %c0_6 = arith.constant 0 : index
    %10 = vector.load %arg8[%c12, %c0_6] : memref<36x384xf32, #tpu.memory_space<vmem>>, vector<4x384xf32>
    tpu.vector_store %arg8[%c12, %c0_6], %9 {strides = array<i32>} : memref<36x384xf32, #tpu.memory_space<vmem>>, vector<4x384xf32>,
    %c18_i32 = arith.constant 18 : i32
    %11 = tpu.dynamic_rotate %2 by %c18_i32 dim 1 : vector<4x384xf32>, i32 -> vector<4x384xf32>
    %c16 = arith.constant 16 : index
    %c0_7 = arith.constant 0 : index
    %12 = vector.load %arg8[%c16, %c0_7] : memref<36x384xf32, #tpu.memory_space<vmem>>, vector<4x384xf32>
    tpu.vector_store %arg8[%c16, %c0_7], %11 {strides = array<i32>} : memref<36x384xf32, #tpu.memory_space<vmem>>, vector<4x384xf32>,
    %c17_i32 = arith.constant 17 : i32
    %13 = tpu.dynamic_rotate %2 by %c17_i32 dim 1 : vector<4x384xf32>, i32 -> vector<4x384xf32>
    %c20 = arith.constant 20 : index
    %c0_8 = arith.constant 0 : index
    %14 = vector.load %arg8[%c20, %c0_8] : memref<36x384xf32, #tpu.memory_space<vmem>>, vector<4x384xf32>
    tpu.vector_store %arg8[%c20, %c0_8], %13 {strides = array<i32>} : memref<36x384xf32, #tpu.memory_space<vmem>>, vector<4x384xf32>,
    %c1_i32 = arith.constant 1 : i32
    %15 = tpu.dynamic_rotate %2 by %c1_i32 dim 1 : vector<4x384xf32>, i32 -> vector<4x384xf32>
    %c24 = arith.constant 24 : index
    %c0_9 = arith.constant 0 : index
    %16 = vector.load %arg8[%c24, %c0_9] : memref<36x384xf32, #tpu.memory_space<vmem>>, vector<4x384xf32>
    tpu.vector_store %arg8[%c24, %c0_9], %15 {strides = array<i32>} : memref<36x384xf32, #tpu.memory_space<vmem>>, vector<4x384xf32>,
    %c28 = arith.constant 28 : index
    %c0_10 = arith.constant 0 : index
    %17 = vector.load %arg8[%c28, %c0_10] : memref<36x384xf32, #tpu.memory_space<vmem>>, vector<4x384xf32>
    tpu.vector_store %arg8[%c28, %c0_10], %2 {strides = array<i32>} : memref<36x384xf32, #tpu.memory_space<vmem>>, vector<4x384xf32>,
    %c383_i32 = arith.constant 383 : i32
    %18 = tpu.dynamic_rotate %2 by %c383_i32 dim 1 : vector<4x384xf32>, i32 -> vector<4x384xf32>
    %c32 = arith.constant 32 : index
    %c0_11 = arith.constant 0 : index
    %19 = vector.load %arg8[%c32, %c0_11] : memref<36x384xf32, #tpu.memory_space<vmem>>, vector<4x384xf32>
    tpu.vector_store %arg8[%c32, %c0_11], %18 {strides = array<i32>} : memref<36x384xf32, #tpu.memory_space<vmem>>, vector<4x384xf32>,
    %c0_12 = arith.constant 0 : index
    %c0_13 = arith.constant 0 : index
    %20 = vector.load %arg2[%c0_12, %c0_13] : memref<8x36xbf16, #tpu.memory_space<vmem>>, vector<8x36xbf16>
    %c0_14 = arith.constant 0 : index
    %c0_15 = arith.constant 0 : index
    %21 = vector.load %arg8[%c0_14, %c0_15] : memref<36x384xf32, #tpu.memory_space<vmem>>, vector<36x384xf32>
    %22 = arith.truncf %21 : vector<36x384xf32> to vector<36x384xbf16>
    %cst = arith.constant dense<0.000000e+00> : vector<8x384xf32>
    %23 = tpu.matmul %20, %22, %cst {dimension_numbers = #tpu.dot_dimension_numbers<[1], [0], [0], [1], [0, 0, 1, 1], [], []>} : vector<8x36xbf16>, vector<36x384xbf16>, vector<8x384xf32> -> vector<8x384xf32>
    %c0_16 = arith.constant 0 : index
    %c0_17 = arith.constant 0 : index
    %24 = vector.load %arg3[%c0_16, %c0_17] : memref<8x1xf32, #tpu.memory_space<vmem>>, vector<8x1xf32>
    %25 = vector.broadcast %24 : vector<8x1xf32> to vector<8x384xf32>
    %26 = arith.addf %23, %25 : vector<8x384xf32>
    %cst_18 = arith.constant 0.000000e+00 : f32
    %27 = vector.broadcast %cst_18 : f32 to vector<8x384xf32>
    %28 = arith.cmpf ogt, %26, %27 : vector<8x384xf32>
    %cst_19 = arith.constant 2.000000e-01 : f32
    %29 = vector.broadcast %cst_19 : f32 to vector<8x384xf32>
    %30 = arith.mulf %29, %26 : vector<8x384xf32>
    %31 = arith.select %28, %26, %30 : vector<8x384xi1>, vector<8x384xf32>
    %32 = arith.mulf %31, %31 : vector<8x384xf32>
    %cst_20 = arith.constant dense<0.000000e+00> : vector<384xf32>
    %33 = vector.multi_reduction <add>, %32, %cst_20 [0] : vector<8x384xf32> to vector<384xf32>
    %34 = vector.shape_cast %33 : vector<384xf32> to vector<1x384xf32>
    %cst_21 = arith.constant 8.000000e+00 : f32
    %35 = vector.broadcast %cst_21 : f32 to vector<1x384xf32>
    %36 = arith.divf %34, %35 : vector<1x384xf32>
    %cst_22 = arith.constant 9.99999993E-9 : f32
    %37 = vector.broadcast %cst_22 : f32 to vector<1x384xf32>
    %38 = arith.addf %36, %37 : vector<1x384xf32>
    %39 = math.rsqrt %38 : vector<1x384xf32>
    %40 = vector.broadcast %39 : vector<1x384xf32> to vector<8x384xf32>
    %41 = arith.mulf %31, %40 : vector<8x384xf32>
    %c0_23 = arith.constant 0 : index
    %c0_24 = arith.constant 0 : index
    %42 = vector.load %arg6[%c0_23, %c0_24] : memref<1x384xf32, #tpu.memory_space<vmem>>, vector<1x384xf32>
    %43 = vector.broadcast %42 : vector<1x384xf32> to vector<8x384xf32>
    %44 = arith.mulf %41, %43 : vector<8x384xf32>
    %c19_i32_25 = arith.constant 19 : i32
    %45 = tpu.dynamic_rotate %44 by %c19_i32_25 dim 1 : vector<8x384xf32>, i32 -> vector<8x384xf32>
    %c0_26 = arith.constant 0 : index
    %c0_27 = arith.constant 0 : index
    %46 = vector.load %arg9[%c0_26, %c0_27] : memref<72x384xf32, #tpu.memory_space<vmem>>, vector<8x384xf32>
    tpu.vector_store %arg9[%c0_26, %c0_27], %45 {strides = array<i32>} : memref<72x384xf32, #tpu.memory_space<vmem>>, vector<8x384xf32>,
    %c18_i32_28 = arith.constant 18 : i32
    %47 = tpu.dynamic_rotate %44 by %c18_i32_28 dim 1 : vector<8x384xf32>, i32 -> vector<8x384xf32>
    %c8_29 = arith.constant 8 : index
    %c0_30 = arith.constant 0 : index
    %48 = vector.load %arg9[%c8_29, %c0_30] : memref<72x384xf32, #tpu.memory_space<vmem>>, vector<8x384xf32>
    tpu.vector_store %arg9[%c8_29, %c0_30], %47 {strides = array<i32>} : memref<72x384xf32, #tpu.memory_space<vmem>>, vector<8x384xf32>,
    %c17_i32_31 = arith.constant 17 : i32
    %49 = tpu.dynamic_rotate %44 by %c17_i32_31 dim 1 : vector<8x384xf32>, i32 -> vector<8x384xf32>
    %c16_32 = arith.constant 16 : index
    %c0_33 = arith.constant 0 : index
    %50 = vector.load %arg9[%c16_32, %c0_33] : memref<72x384xf32, #tpu.memory_space<vmem>>, vector<8x384xf32>
    tpu.vector_store %arg9[%c16_32, %c0_33], %49 {strides = array<i32>} : memref<72x384xf32, #tpu.memory_space<vmem>>, vector<8x384xf32>,
    %c1_i32_34 = arith.constant 1 : i32
    %51 = tpu.dynamic_rotate %44 by %c1_i32_34 dim 1 : vector<8x384xf32>, i32 -> vector<8x384xf32>
    %c24_35 = arith.constant 24 : index
    %c0_36 = arith.constant 0 : index
    %52 = vector.load %arg9[%c24_35, %c0_36] : memref<72x384xf32, #tpu.memory_space<vmem>>, vector<8x384xf32>
    tpu.vector_store %arg9[%c24_35, %c0_36], %51 {strides = array<i32>} : memref<72x384xf32, #tpu.memory_space<vmem>>, vector<8x384xf32>,
    %c32_37 = arith.constant 32 : index
    %c0_38 = arith.constant 0 : index
    %53 = vector.load %arg9[%c32_37, %c0_38] : memref<72x384xf32, #tpu.memory_space<vmem>>, vector<8x384xf32>
    tpu.vector_store %arg9[%c32_37, %c0_38], %44 {strides = array<i32>} : memref<72x384xf32, #tpu.memory_space<vmem>>, vector<8x384xf32>,
    %c383_i32_39 = arith.constant 383 : i32
    %54 = tpu.dynamic_rotate %44 by %c383_i32_39 dim 1 : vector<8x384xf32>, i32 -> vector<8x384xf32>
    %c40 = arith.constant 40 : index
    %c0_40 = arith.constant 0 : index
    %55 = vector.load %arg9[%c40, %c0_40] : memref<72x384xf32, #tpu.memory_space<vmem>>, vector<8x384xf32>
    tpu.vector_store %arg9[%c40, %c0_40], %54 {strides = array<i32>} : memref<72x384xf32, #tpu.memory_space<vmem>>, vector<8x384xf32>,
    %c367_i32 = arith.constant 367 : i32
    %56 = tpu.dynamic_rotate %44 by %c367_i32 dim 1 : vector<8x384xf32>, i32 -> vector<8x384xf32>
    %c48 = arith.constant 48 : index
    %c0_41 = arith.constant 0 : index
    %57 = vector.load %arg9[%c48, %c0_41] : memref<72x384xf32, #tpu.memory_space<vmem>>, vector<8x384xf32>
    tpu.vector_store %arg9[%c48, %c0_41], %56 {strides = array<i32>} : memref<72x384xf32, #tpu.memory_space<vmem>>, vector<8x384xf32>,
    %c366_i32 = arith.constant 366 : i32
    %58 = tpu.dynamic_rotate %44 by %c366_i32 dim 1 : vector<8x384xf32>, i32 -> vector<8x384xf32>
    %c56 = arith.constant 56 : index
    %c0_42 = arith.constant 0 : index
    %59 = vector.load %arg9[%c56, %c0_42] : memref<72x384xf32, #tpu.memory_space<vmem>>, vector<8x384xf32>
    tpu.vector_store %arg9[%c56, %c0_42], %58 {strides = array<i32>} : memref<72x384xf32, #tpu.memory_space<vmem>>, vector<8x384xf32>,
    %c365_i32 = arith.constant 365 : i32
    %60 = tpu.dynamic_rotate %44 by %c365_i32 dim 1 : vector<8x384xf32>, i32 -> vector<8x384xf32>
    %c64 = arith.constant 64 : index
    %c0_43 = arith.constant 0 : index
    %61 = vector.load %arg9[%c64, %c0_43] : memref<72x384xf32, #tpu.memory_space<vmem>>, vector<8x384xf32>
    tpu.vector_store %arg9[%c64, %c0_43], %60 {strides = array<i32>} : memref<72x384xf32, #tpu.memory_space<vmem>>, vector<8x384xf32>,
    %c0_44 = arith.constant 0 : index
    %c0_45 = arith.constant 0 : index
    %62 = vector.load %arg4[%c0_44, %c0_45] : memref<8x72xbf16, #tpu.memory_space<vmem>>, vector<8x72xbf16>
    %c0_46 = arith.constant 0 : index
    %c0_47 = arith.constant 0 : index
    %63 = vector.load %arg9[%c0_46, %c0_47] : memref<72x384xf32, #tpu.memory_space<vmem>>, vector<72x384xf32>
    %64 = arith.truncf %63 : vector<72x384xf32> to vector<72x384xbf16>
    %cst_48 = arith.constant dense<0.000000e+00> : vector<8x384xf32>
    %65 = tpu.matmul %62, %64, %cst_48 {dimension_numbers = #tpu.dot_dimension_numbers<[1], [0], [0], [1], [0, 0, 1, 1], [], []>} : vector<8x72xbf16>, vector<72x384xbf16>, vector<8x384xf32> -> vector<8x384xf32>
    %c0_49 = arith.constant 0 : index
    %c0_50 = arith.constant 0 : index
    %66 = vector.load %arg5[%c0_49, %c0_50] : memref<8x1xf32, #tpu.memory_space<vmem>>, vector<8x1xf32>
    %67 = vector.broadcast %66 : vector<8x1xf32> to vector<8x384xf32>
    %68 = arith.addf %65, %67 : vector<8x384xf32>
    %cst_51 = arith.constant 0.000000e+00 : f32
    %69 = vector.broadcast %cst_51 : f32 to vector<8x384xf32>
    %70 = arith.cmpf ogt, %68, %69 : vector<8x384xf32>
    %cst_52 = arith.constant 2.000000e-01 : f32
    %71 = vector.broadcast %cst_52 : f32 to vector<8x384xf32>
    %72 = arith.mulf %71, %68 : vector<8x384xf32>
    %73 = arith.select %70, %68, %72 : vector<8x384xi1>, vector<8x384xf32>
    %74 = arith.mulf %73, %73 : vector<8x384xf32>
    %cst_53 = arith.constant dense<0.000000e+00> : vector<384xf32>
    %75 = vector.multi_reduction <add>, %74, %cst_53 [0] : vector<8x384xf32> to vector<384xf32>
    %76 = vector.shape_cast %75 : vector<384xf32> to vector<1x384xf32>
    %cst_54 = arith.constant 8.000000e+00 : f32
    %77 = vector.broadcast %cst_54 : f32 to vector<1x384xf32>
    %78 = arith.divf %76, %77 : vector<1x384xf32>
    %cst_55 = arith.constant 9.99999993E-9 : f32
    %79 = vector.broadcast %cst_55 : f32 to vector<1x384xf32>
    %80 = arith.addf %78, %79 : vector<1x384xf32>
    %81 = math.rsqrt %80 : vector<1x384xf32>
    %82 = vector.broadcast %81 : vector<1x384xf32> to vector<8x384xf32>
    %83 = arith.mulf %73, %82 : vector<8x384xf32>
    %84 = vector.extract_strided_slice %83 {offsets = [0, 19], sizes = [8, 16], strides = [1, 1]} : vector<8x384xf32> to vector<8x16xf32>
    %c0_56 = arith.constant 0 : index
    %c0_57 = arith.constant 0 : index
    %c0_58 = arith.constant 0 : index
    %85 = vector.load %arg7[%c0_56, %c0_57, %c0_58] : memref<1x8x256xf32, #tpu.memory_space<vmem>>, vector<1x8x16xf32>
    %86 = vector.shape_cast %85 : vector<1x8x16xf32> to vector<8x16xf32>
    %87 = vector.shape_cast %84 : vector<8x16xf32> to vector<1x8x16xf32>
    tpu.vector_store %arg7[%c0_56, %c0_57, %c0_58], %87 {strides = array<i32>} : memref<1x8x256xf32, #tpu.memory_space<vmem>>, vector<1x8x16xf32>,
    %88 = vector.extract_strided_slice %83 {offsets = [0, 37], sizes = [8, 16], strides = [1, 1]} : vector<8x384xf32> to vector<8x16xf32>
    %c0_59 = arith.constant 0 : index
    %c0_60 = arith.constant 0 : index
    %c16_61 = arith.constant 16 : index
    %89 = vector.load %arg7[%c0_59, %c0_60, %c16_61] : memref<1x8x256xf32, #tpu.memory_space<vmem>>, vector<1x8x16xf32>
    %90 = vector.shape_cast %89 : vector<1x8x16xf32> to vector<8x16xf32>
    %91 = vector.shape_cast %88 : vector<8x16xf32> to vector<1x8x16xf32>
    tpu.vector_store %arg7[%c0_59, %c0_60, %c16_61], %91 {strides = array<i32>} : memref<1x8x256xf32, #tpu.memory_space<vmem>>, vector<1x8x16xf32>,
    %92 = vector.extract_strided_slice %83 {offsets = [0, 55], sizes = [8, 16], strides = [1, 1]} : vector<8x384xf32> to vector<8x16xf32>
    %c0_62 = arith.constant 0 : index
    %c0_63 = arith.constant 0 : index
    %c32_64 = arith.constant 32 : index
    %93 = vector.load %arg7[%c0_62, %c0_63, %c32_64] : memref<1x8x256xf32, #tpu.memory_space<vmem>>, vector<1x8x16xf32>
    %94 = vector.shape_cast %93 : vector<1x8x16xf32> to vector<8x16xf32>
    %95 = vector.shape_cast %92 : vector<8x16xf32> to vector<1x8x16xf32>
    tpu.vector_store %arg7[%c0_62, %c0_63, %c32_64], %95 {strides = array<i32>} : memref<1x8x256xf32, #tpu.memory_space<vmem>>, vector<1x8x16xf32>,
    %96 = vector.extract_strided_slice %83 {offsets = [0, 73], sizes = [8, 16], strides = [1, 1]} : vector<8x384xf32> to vector<8x16xf32>
    %c0_65 = arith.constant 0 : index
    %c0_66 = arith.constant 0 : index
    %c48_67 = arith.constant 48 : index
    %97 = vector.load %arg7[%c0_65, %c0_66, %c48_67] : memref<1x8x256xf32, #tpu.memory_space<vmem>>, vector<1x8x16xf32>
    %98 = vector.shape_cast %97 : vector<1x8x16xf32> to vector<8x16xf32>
    %99 = vector.shape_cast %96 : vector<8x16xf32> to vector<1x8x16xf32>
    tpu.vector_store %arg7[%c0_65, %c0_66, %c48_67], %99 {strides = array<i32>} : memref<1x8x256xf32, #tpu.memory_space<vmem>>, vector<1x8x16xf32>,
    %100 = vector.extract_strided_slice %83 {offsets = [0, 91], sizes = [8, 16], strides = [1, 1]} : vector<8x384xf32> to vector<8x16xf32>
    %c0_68 = arith.constant 0 : index
    %c0_69 = arith.constant 0 : index
    %c64_70 = arith.constant 64 : index
    %101 = vector.load %arg7[%c0_68, %c0_69, %c64_70] : memref<1x8x256xf32, #tpu.memory_space<vmem>>, vector<1x8x16xf32>
    %102 = vector.shape_cast %101 : vector<1x8x16xf32> to vector<8x16xf32>
    %103 = vector.shape_cast %100 : vector<8x16xf32> to vector<1x8x16xf32>
    tpu.vector_store %arg7[%c0_68, %c0_69, %c64_70], %103 {strides = array<i32>} : memref<1x8x256xf32, #tpu.memory_space<vmem>>, vector<1x8x16xf32>,
    %104 = vector.extract_strided_slice %83 {offsets = [0, 109], sizes = [8, 16], strides = [1, 1]} : vector<8x384xf32> to vector<8x16xf32>
    %c0_71 = arith.constant 0 : index
    %c0_72 = arith.constant 0 : index
    %c80 = arith.constant 80 : index
    %105 = vector.load %arg7[%c0_71, %c0_72, %c80] : memref<1x8x256xf32, #tpu.memory_space<vmem>>, vector<1x8x16xf32>
    %106 = vector.shape_cast %105 : vector<1x8x16xf32> to vector<8x16xf32>
    %107 = vector.shape_cast %104 : vector<8x16xf32> to vector<1x8x16xf32>
    tpu.vector_store %arg7[%c0_71, %c0_72, %c80], %107 {strides = array<i32>} : memref<1x8x256xf32, #tpu.memory_space<vmem>>, vector<1x8x16xf32>,
    %108 = vector.extract_strided_slice %83 {offsets = [0, 127], sizes = [8, 16], strides = [1, 1]} : vector<8x384xf32> to vector<8x16xf32>
    %c0_73 = arith.constant 0 : index
    %c0_74 = arith.constant 0 : index
    %c96 = arith.constant 96 : index
    %109 = vector.load %arg7[%c0_73, %c0_74, %c96] : memref<1x8x256xf32, #tpu.memory_space<vmem>>, vector<1x8x16xf32>
    %110 = vector.shape_cast %109 : vector<1x8x16xf32> to vector<8x16xf32>
    %111 = vector.shape_cast %108 : vector<8x16xf32> to vector<1x8x16xf32>
    tpu.vector_store %arg7[%c0_73, %c0_74, %c96], %111 {strides = array<i32>} : memref<1x8x256xf32, #tpu.memory_space<vmem>>, vector<1x8x16xf32>,
    %112 = vector.extract_strided_slice %83 {offsets = [0, 145], sizes = [8, 16], strides = [1, 1]} : vector<8x384xf32> to vector<8x16xf32>
    %c0_75 = arith.constant 0 : index
    %c0_76 = arith.constant 0 : index
    %c112 = arith.constant 112 : index
    %113 = vector.load %arg7[%c0_75, %c0_76, %c112] : memref<1x8x256xf32, #tpu.memory_space<vmem>>, vector<1x8x16xf32>
    %114 = vector.shape_cast %113 : vector<1x8x16xf32> to vector<8x16xf32>
    %115 = vector.shape_cast %112 : vector<8x16xf32> to vector<1x8x16xf32>
    tpu.vector_store %arg7[%c0_75, %c0_76, %c112], %115 {strides = array<i32>} : memref<1x8x256xf32, #tpu.memory_space<vmem>>, vector<1x8x16xf32>,
    %116 = vector.extract_strided_slice %83 {offsets = [0, 163], sizes = [8, 16], strides = [1, 1]} : vector<8x384xf32> to vector<8x16xf32>
    %c0_77 = arith.constant 0 : index
    %c0_78 = arith.constant 0 : index
    %c128 = arith.constant 128 : index
    %117 = vector.load %arg7[%c0_77, %c0_78, %c128] : memref<1x8x256xf32, #tpu.memory_space<vmem>>, vector<1x8x16xf32>
    %118 = vector.shape_cast %117 : vector<1x8x16xf32> to vector<8x16xf32>
    %119 = vector.shape_cast %116 : vector<8x16xf32> to vector<1x8x16xf32>
    tpu.vector_store %arg7[%c0_77, %c0_78, %c128], %119 {strides = array<i32>} : memref<1x8x256xf32, #tpu.memory_space<vmem>>, vector<1x8x16xf32>,
    %120 = vector.extract_strided_slice %83 {offsets = [0, 181], sizes = [8, 16], strides = [1, 1]} : vector<8x384xf32> to vector<8x16xf32>
    %c0_79 = arith.constant 0 : index
    %c0_80 = arith.constant 0 : index
    %c144 = arith.constant 144 : index
    %121 = vector.load %arg7[%c0_79, %c0_80, %c144] : memref<1x8x256xf32, #tpu.memory_space<vmem>>, vector<1x8x16xf32>
    %122 = vector.shape_cast %121 : vector<1x8x16xf32> to vector<8x16xf32>
    %123 = vector.shape_cast %120 : vector<8x16xf32> to vector<1x8x16xf32>
    tpu.vector_store %arg7[%c0_79, %c0_80, %c144], %123 {strides = array<i32>} : memref<1x8x256xf32, #tpu.memory_space<vmem>>, vector<1x8x16xf32>,
    %124 = vector.extract_strided_slice %83 {offsets = [0, 199], sizes = [8, 16], strides = [1, 1]} : vector<8x384xf32> to vector<8x16xf32>
    %c0_81 = arith.constant 0 : index
    %c0_82 = arith.constant 0 : index
    %c160 = arith.constant 160 : index
    %125 = vector.load %arg7[%c0_81, %c0_82, %c160] : memref<1x8x256xf32, #tpu.memory_space<vmem>>, vector<1x8x16xf32>
    %126 = vector.shape_cast %125 : vector<1x8x16xf32> to vector<8x16xf32>
    %127 = vector.shape_cast %124 : vector<8x16xf32> to vector<1x8x16xf32>
    tpu.vector_store %arg7[%c0_81, %c0_82, %c160], %127 {strides = array<i32>} : memref<1x8x256xf32, #tpu.memory_space<vmem>>, vector<1x8x16xf32>,
    %128 = vector.extract_strided_slice %83 {offsets = [0, 217], sizes = [8, 16], strides = [1, 1]} : vector<8x384xf32> to vector<8x16xf32>
    %c0_83 = arith.constant 0 : index
    %c0_84 = arith.constant 0 : index
    %c176 = arith.constant 176 : index
    %129 = vector.load %arg7[%c0_83, %c0_84, %c176] : memref<1x8x256xf32, #tpu.memory_space<vmem>>, vector<1x8x16xf32>
    %130 = vector.shape_cast %129 : vector<1x8x16xf32> to vector<8x16xf32>
    %131 = vector.shape_cast %128 : vector<8x16xf32> to vector<1x8x16xf32>
    tpu.vector_store %arg7[%c0_83, %c0_84, %c176], %131 {strides = array<i32>} : memref<1x8x256xf32, #tpu.memory_space<vmem>>, vector<1x8x16xf32>,
    %132 = vector.extract_strided_slice %83 {offsets = [0, 235], sizes = [8, 16], strides = [1, 1]} : vector<8x384xf32> to vector<8x16xf32>
    %c0_85 = arith.constant 0 : index
    %c0_86 = arith.constant 0 : index
    %c192 = arith.constant 192 : index
    %133 = vector.load %arg7[%c0_85, %c0_86, %c192] : memref<1x8x256xf32, #tpu.memory_space<vmem>>, vector<1x8x16xf32>
    %134 = vector.shape_cast %133 : vector<1x8x16xf32> to vector<8x16xf32>
    %135 = vector.shape_cast %132 : vector<8x16xf32> to vector<1x8x16xf32>
    tpu.vector_store %arg7[%c0_85, %c0_86, %c192], %135 {strides = array<i32>} : memref<1x8x256xf32, #tpu.memory_space<vmem>>, vector<1x8x16xf32>,
    %136 = vector.extract_strided_slice %83 {offsets = [0, 253], sizes = [8, 16], strides = [1, 1]} : vector<8x384xf32> to vector<8x16xf32>
    %c0_87 = arith.constant 0 : index
    %c0_88 = arith.constant 0 : index
    %c208 = arith.constant 208 : index
    %137 = vector.load %arg7[%c0_87, %c0_88, %c208] : memref<1x8x256xf32, #tpu.memory_space<vmem>>, vector<1x8x16xf32>
    %138 = vector.shape_cast %137 : vector<1x8x16xf32> to vector<8x16xf32>
    %139 = vector.shape_cast %136 : vector<8x16xf32> to vector<1x8x16xf32>
    tpu.vector_store %arg7[%c0_87, %c0_88, %c208], %139 {strides = array<i32>} : memref<1x8x256xf32, #tpu.memory_space<vmem>>, vector<1x8x16xf32>,
    %140 = vector.extract_strided_slice %83 {offsets = [0, 271], sizes = [8, 16], strides = [1, 1]} : vector<8x384xf32> to vector<8x16xf32>
    %c0_89 = arith.constant 0 : index
    %c0_90 = arith.constant 0 : index
    %c224 = arith.constant 224 : index
    %141 = vector.load %arg7[%c0_89, %c0_90, %c224] : memref<1x8x256xf32, #tpu.memory_space<vmem>>, vector<1x8x16xf32>
    %142 = vector.shape_cast %141 : vector<1x8x16xf32> to vector<8x16xf32>
    %143 = vector.shape_cast %140 : vector<8x16xf32> to vector<1x8x16xf32>
    tpu.vector_store %arg7[%c0_89, %c0_90, %c224], %143 {strides = array<i32>} : memref<1x8x256xf32, #tpu.memory_space<vmem>>, vector<1x8x16xf32>,
    %144 = vector.extract_strided_slice %83 {offsets = [0, 289], sizes = [8, 16], strides = [1, 1]} : vector<8x384xf32> to vector<8x16xf32>
    %c0_91 = arith.constant 0 : index
    %c0_92 = arith.constant 0 : index
    %c240 = arith.constant 240 : index
    %145 = vector.load %arg7[%c0_91, %c0_92, %c240] : memref<1x8x256xf32, #tpu.memory_space<vmem>>, vector<1x8x16xf32>
    %146 = vector.shape_cast %145 : vector<1x8x16xf32> to vector<8x16xf32>
    %147 = vector.shape_cast %144 : vector<8x16xf32> to vector<1x8x16xf32>
    tpu.vector_store %arg7[%c0_91, %c0_92, %c240], %147 {strides = array<i32>} : memref<1x8x256xf32, #tpu.memory_space<vmem>>, vector<1x8x16xf32>,
    return
  }
  func.func @transform_0(%arg0: i32) -> (i32, i32, i32) {
    %c0_i32 = arith.constant 0 : i32
    %c0_i32_0 = arith.constant 0 : i32
    %c0_i32_1 = arith.constant 0 : i32
    return %arg0, %c0_i32, %c0_i32_0 : i32, i32, i32
  }
  func.func @transform_1(%arg0: i32) -> (i32, i32) {
    %c0_i32 = arith.constant 0 : i32
    %c0_i32_0 = arith.constant 0 : i32
    %c0_i32_1 = arith.constant 0 : i32
    return %c0_i32, %c0_i32_0 : i32, i32
  }
  func.func @transform_2(%arg0: i32) -> (i32, i32) {
    %c0_i32 = arith.constant 0 : i32
    %c0_i32_0 = arith.constant 0 : i32
    %c0_i32_1 = arith.constant 0 : i32
    return %c0_i32, %c0_i32_0 : i32, i32
  }
  func.func @transform_3(%arg0: i32) -> (i32, i32) {
    %c0_i32 = arith.constant 0 : i32
    %c0_i32_0 = arith.constant 0 : i32
    %c0_i32_1 = arith.constant 0 : i32
    return %c0_i32, %c0_i32_0 : i32, i32
  }
  func.func @transform_4(%arg0: i32) -> (i32, i32) {
    %c0_i32 = arith.constant 0 : i32
    %c0_i32_0 = arith.constant 0 : i32
    %c0_i32_1 = arith.constant 0 : i32
    return %c0_i32, %c0_i32_0 : i32, i32
  }
  func.func @transform_5(%arg0: i32) -> (i32, i32) {
    %c0_i32 = arith.constant 0 : i32
    %c0_i32_0 = arith.constant 0 : i32
    %c0_i32_1 = arith.constant 0 : i32
    return %c0_i32, %c0_i32_0 : i32, i32
  }
  func.func @transform_6(%arg0: i32) -> (i32, i32, i32) {
    %c0_i32 = arith.constant 0 : i32
    %c0_i32_0 = arith.constant 0 : i32
    %c0_i32_1 = arith.constant 0 : i32
    return %arg0, %c0_i32, %c0_i32_0 : i32, i32, i32
  }
}

</mosaic_0001>

<llo_original>
// kernel: _lambda_.1
$region0: #{_lambda_.1}
  #allocation0 [shape = 'u32[]', space=smem, size = 0x4, offset = 0x4, fixed_abs, tag = 'smem constant byte address 0x4 - core index']
  #allocation1 [shape = 'u32[72,128]{1,0:T(1,128)}', space=vmem, size = 0x9000, scoped, tag = 'internal scratch']
  #allocation2 [shape = 'f32[36,384]{1,0:T(8,128)}', space=vmem, size = 0xf000, scoped, tag = 'scratch operand']
  #allocation3 [shape = 'f32[72,384]{1,0:T(8,128)}', space=vmem, size = 0x1b000, scoped, tag = 'scratch operand']
  %s0 = inlined_call_operand.vmem [shape: bf16[2,4,384], index: 0, kind: input, shape index: {}]
  %s1 = inlined_call_operand.vmem [shape: bf16[8,36], index: 1, kind: input, shape index: {}]
  %s2 = inlined_call_operand.vmem [shape: f32[8,1], index: 2, kind: input, shape index: {}]
  %s3 = inlined_call_operand.vmem [shape: bf16[8,72], index: 3, kind: input, shape index: {}]
  %s4 = inlined_call_operand.vmem [shape: f32[8,1], index: 4, kind: input, shape index: {}]
  %s5 = inlined_call_operand.vmem [shape: f32[1,384], index: 5, kind: input, shape index: {}]
  %s6 = inlined_call_operand.vmem [shape: f32[2,8,256], index: 6, kind: output, shape index: {}]
  %s7 = sld [smem:[#allocation0]]
  $region57: #{_lambda_.1} parent=0
    _
  %s9 = ssub.s32 1, %s7
  %s10 = scalar_select 0, %s9, %s7
  loop: start=0, step=1, limit=4
  $region2: #{_lambda_.1} parent=0 // loop_pre_header
    _
  $region3: #{_lambda_.1} parent=0 // loop_header
    %s12 = sphi 0, %s16
    %p13 = scmp.ge.s32.totalorder %s12, 4
    %s22 = sphi 0, %s24
    %s25 = sphi 0, %s22
    %s26 = sphi 0, %s25
    %s42 = sphi 0, %s26
    %s46 = sphi 0, %s46
    %s48 = sphi 0, %s46
    %s49 = sphi 0, %s48
    %s63 = sphi 0, %s49
    %s67 = sphi 0, %s67
    %s69 = sphi 0, %s67
    %s70 = sphi 0, %s69
    %s84 = sphi 0, %s70
    %s88 = sphi 0, %s88
    %s90 = sphi 0, %s88
    %s91 = sphi 0, %s90
    %s105 = sphi 0, %s91
    %s109 = sphi 0, %s109
    %s111 = sphi 0, %s109
    %s112 = sphi 0, %s111
    %s126 = sphi 0, %s112
    %s130 = sphi 0, %s130
    %s132 = sphi 0, %s130
    %s133 = sphi 0, %s132
    %s147 = sphi 0, %s133
    %s153 = sphi 0, %s155
    %s156 = sphi 0, %s153
    %s157 = sphi 0, %s156
    %s173 = sphi 0, %s157
  $region4: #{_lambda_.1} parent=0 // loop_header_branch
    %15 = sbr.rel (%p13) target = $region8
  $region5: #{_lambda_.1} parent=0 // loop_body
    %s17 = ssub.s32 %s12, 1
    %s18 = ssub.s32 %s12, 2
    %s19 = sadd.s32 %s12, 1
    %s20 = ssub.s32 %s12, %s19
    %p21 = scmp.eq.s32.totalorder %s20, 0
    %s23 = sadd.s32 %s22, 1
    %s24 = scalar_select %p21, %s22, %s23
    %p27 = pneg %p21
    %p28 = scmp.eq.s32.totalorder %s12, 1
    %p29 = por %p27, %p28
    %p30 = scmp.ne.s32.totalorder %s22, %s25
    %p31 = scmp.eq.s32.totalorder %s12, 0
    %p32 = por %p30, %p31
    %p33 = scmp.ne.s32.totalorder %s22, %s25
    %p34 = scmp.eq.s32.totalorder %s17, 1
    %p35 = por %p33, %p34
    %p36 = scmp.ne.s32.totalorder %s25, %s26
    %p37 = scmp.eq.s32.totalorder %s17, 0
    %p38 = por %p36, %p37
    %p39 = scmp.ne.s32.totalorder %s25, %s26
    %p40 = scmp.eq.s32.totalorder %s18, 1
    %p41 = por %p39, %p40
    %p43 = scmp.ne.s32.totalorder %s26, %s42
    %p44 = scmp.eq.s32.totalorder %s18, 0
    %p45 = por %p43, %p44
    %s47 = sadd.s32 %s46, 1
    %p50 = scmp.eq.s32.totalorder %s12, 1
    %p51 = scmp.ne.s32.totalorder %s46, %s48
    %p52 = scmp.eq.s32.totalorder %s12, 0
    %p53 = por %p51, %p52
    %p54 = scmp.ne.s32.totalorder %s46, %s48
    %p55 = scmp.eq.s32.totalorder %s17, 1
    %p56 = por %p54, %p55
    %p57 = scmp.ne.s32.totalorder %s48, %s49
    %p58 = scmp.eq.s32.totalorder %s17, 0
    %p59 = por %p57, %p58
    %p60 = scmp.ne.s32.totalorder %s48, %s49
    %p61 = scmp.eq.s32.totalorder %s18, 1
    %p62 = por %p60, %p61
    %p64 = scmp.ne.s32.totalorder %s49, %s63
    %p65 = scmp.eq.s32.totalorder %s18, 0
    %p66 = por %p64, %p65
    %s68 = sadd.s32 %s67, 1
    %p71 = scmp.eq.s32.totalorder %s12, 1
    %p72 = scmp.ne.s32.totalorder %s67, %s69
    %p73 = scmp.eq.s32.totalorder %s12, 0
    %p74 = por %p72, %p73
    %p75 = scmp.ne.s32.totalorder %s67, %s69
    %p76 = scmp.eq.s32.totalorder %s17, 1
    %p77 = por %p75, %p76
    %p78 = scmp.ne.s32.totalorder %s69, %s70
    %p79 = scmp.eq.s32.totalorder %s17, 0
    %p80 = por %p78, %p79
    %p81 = scmp.ne.s32.totalorder %s69, %s70
    %p82 = scmp.eq.s32.totalorder %s18, 1
    %p83 = por %p81, %p82
    %p85 = scmp.ne.s32.totalorder %s70, %s84
    %p86 = scmp.eq.s32.totalorder %s18, 0
    %p87 = por %p85, %p86
    %s89 = sadd.s32 %s88, 1
    %p92 = scmp.eq.s32.totalorder %s12, 1
    %p93 = scmp.ne.s32.totalorder %s88, %s90
    %p94 = scmp.eq.s32.totalorder %s12, 0
    %p95 = por %p93, %p94
    %p96 = scmp.ne.s32.totalorder %s88, %s90
    %p97 = scmp.eq.s32.totalorder %s17, 1
    %p98 = por %p96, %p97
    %p99 = scmp.ne.s32.totalorder %s90, %s91
    %p100 = scmp.eq.s32.totalorder %s17, 0
    %p101 = por %p99, %p100
    %p102 = scmp.ne.s32.totalorder %s90, %s91
    %p103 = scmp.eq.s32.totalorder %s18, 1
    %p104 = por %p102, %p103
    %p106 = scmp.ne.s32.totalorder %s91, %s105
    %p107 = scmp.eq.s32.totalorder %s18, 0
    %p108 = por %p106, %p107
    %s110 = sadd.s32 %s109, 1
    %p113 = scmp.eq.s32.totalorder %s12, 1
    %p114 = scmp.ne.s32.totalorder %s109, %s111
    %p115 = scmp.eq.s32.totalorder %s12, 0
    %p116 = por %p114, %p115
    %p117 = scmp.ne.s32.totalorder %s109, %s111
    %p118 = scmp.eq.s32.totalorder %s17, 1
    %p119 = por %p117, %p118
    %p120 = scmp.ne.s32.totalorder %s111, %s112
    %p121 = scmp.eq.s32.totalorder %s17, 0
    %p122 = por %p120, %p121
    %p123 = scmp.ne.s32.totalorder %s111, %s112
    %p124 = scmp.eq.s32.totalorder %s18, 1
    %p125 = por %p123, %p124
    %p127 = scmp.ne.s32.totalorder %s112, %s126
    %p128 = scmp.eq.s32.totalorder %s18, 0
    %p129 = por %p127, %p128
    %s131 = sadd.s32 %s130, 1
    %p134 = scmp.eq.s32.totalorder %s12, 1
    %p135 = scmp.ne.s32.totalorder %s130, %s132
    %p136 = scmp.eq.s32.totalorder %s12, 0
    %p137 = por %p135, %p136
    %p138 = scmp.ne.s32.totalorder %s130, %s132
    %p139 = scmp.eq.s32.totalorder %s17, 1
    %p140 = por %p138, %p139
    %p141 = scmp.ne.s32.totalorder %s132, %s133
    %p142 = scmp.eq.s32.totalorder %s17, 0
    %p143 = por %p141, %p142
    %p144 = scmp.ne.s32.totalorder %s132, %s133
    %p145 = scmp.eq.s32.totalorder %s18, 1
    %p146 = por %p144, %p145
    %p148 = scmp.ne.s32.totalorder %s133, %s147
    %p149 = scmp.eq.s32.totalorder %s18, 0
    %p150 = por %p148, %p149
    %s151 = ssub.s32 %s12, %s19
    %p152 = scmp.eq.s32.totalorder %s151, 0
    %s154 = sadd.s32 %s153, 1
    %s155 = scalar_select %p152, %s153, %s154
    %p158 = pneg %p152
    %p159 = scmp.eq.s32.totalorder %s12, 1
    %p160 = por %p158, %p159
    %p161 = scmp.ne.s32.totalorder %s153, %s156
    %p162 = scmp.eq.s32.totalorder %s12, 0
    %p163 = por %p161, %p162
    %p164 = scmp.ne.s32.totalorder %s153, %s156
    %p165 = scmp.eq.s32.totalorder %s17, 1
    %p166 = por %p164, %p165
    %p167 = scmp.ne.s32.totalorder %s156, %s157
    %p168 = scmp.eq.s32.totalorder %s17, 0
    %p169 = por %p167, %p168
    %p170 = scmp.ne.s32.totalorder %s156, %s157
    %p171 = scmp.eq.s32.totalorder %s18, 1
    %p172 = por %p170, %p171
    %p174 = scmp.ne.s32.totalorder %s157, %s173
    %p175 = scmp.eq.s32.totalorder %s18, 0
    %p176 = por %p174, %p175
    %p177 = scmp.le.s32.totalorder 1, %s12
    %p178 = scmp.lt.s32.totalorder %s12, 3
    %p179 = pnand %p177, %p178
    %p180 = pneg %p179
    // Predicated region
    $region9: #{_lambda_.1} parent=5 // pred_check
      _
    $region10: #{_lambda_.1} parent=5 // pred_check_branch
      %182 = sbr.rel (%p179) target = $region12
    $region11: #{_lambda_.1} parent=5 // pred_region
      %s183 = ssub.s32 %s12, 1
      // Predicated region
      $region13: #{_lambda_.1} parent=11 // pred_check
        %p184 = pneg %p59
      $region14: #{_lambda_.1} parent=11 // pred_check_branch
        %186 = sbr.rel (%p184) target = $region16
      $region15: #{_lambda_.1} parent=11 // pred_region
        _
      $region16: #{_lambda_.1} parent=11 // pred_fallthru
        _
      // Predicated region
      $region17: #{_lambda_.1} parent=11 // pred_check
        %p187 = pneg %p80
      $region18: #{_lambda_.1} parent=11 // pred_check_branch
        %189 = sbr.rel (%p187) target = $region20
      $region19: #{_lambda_.1} parent=11 // pred_region
        _
      $region20: #{_lambda_.1} parent=11 // pred_fallthru
        _
      // Predicated region
      $region21: #{_lambda_.1} parent=11 // pred_check
        %p190 = pneg %p101
      $region22: #{_lambda_.1} parent=11 // pred_check_branch
        %192 = sbr.rel (%p190) target = $region24
      $region23: #{_lambda_.1} parent=11 // pred_region
        _
      $region24: #{_lambda_.1} parent=11 // pred_fallthru
        _
      // Predicated region
      $region25: #{_lambda_.1} parent=11 // pred_check
        %p193 = pneg %p122
      $region26: #{_lambda_.1} parent=11 // pred_check_branch
        %195 = sbr.rel (%p193) target = $region28
      $region27: #{_lambda_.1} parent=11 // pred_region
        _
      $region28: #{_lambda_.1} parent=11 // pred_fallthru
        _
      // Predicated region
      $region29: #{_lambda_.1} parent=11 // pred_check
        %p196 = pneg %p143
      $region30: #{_lambda_.1} parent=11 // pred_check_branch
        %198 = sbr.rel (%p196) target = $region32
      $region31: #{_lambda_.1} parent=11 // pred_region
        _
      $region32: #{_lambda_.1} parent=11 // pred_fallthru
        _
    $region12: #{_lambda_.1} parent=5 // pred_fallthru
      _
    %p199 = scmp.lt.s32.totalorder %s12, 2
    // Predicated region
    $region33: #{_lambda_.1} parent=5 // pred_check
      %p200 = pneg %p199
    $region34: #{_lambda_.1} parent=5 // pred_check_branch
      %202 = sbr.rel (%p200) target = $region36
    $region35: #{_lambda_.1} parent=5 // pred_region
      // Predicated region
      $region37: #{_lambda_.1} parent=35 // pred_check
        %p203 = pneg %p32
      $region38: #{_lambda_.1} parent=35 // pred_check_branch
        %205 = sbr.rel (%p203) target = $region40
      $region39: #{_lambda_.1} parent=35 // pred_region
        %p206 = scmp.lt.s32.totalorder %s12, 1
        %s207 = scalar_select %p206, %s12, 1
        %s208 = smul.addr %s207, 3
        %s209 = smul.addr %s208, 2
        %s210 = scalar_lea.vmem %s0, %s209
      $region40: #{_lambda_.1} parent=35 // pred_fallthru
        _
    $region36: #{_lambda_.1} parent=5 // pred_fallthru
      _
    %p211 = scmp.le.s32.totalorder 1, %s12
    %p212 = scmp.lt.s32.totalorder %s12, 3
    %p213 = pnand %p211, %p212
    %p214 = pneg %p213
    // Predicated region
    $region41: #{_lambda_.1} parent=5 // pred_check
      _
    $region42: #{_lambda_.1} parent=5 // pred_check_branch
      %216 = sbr.rel (%p213) target = $region44
    $region43: #{_lambda_.1} parent=5 // pred_region
      %s217 = ssub.s32 %s12, 1
      %p218 = scmp.lt.s32.totalorder %s17, 1
      %s219 = scalar_select %p218, %s17, 1
      %s220 = smul.addr %s219, 3
      %s221 = smul.addr %s220, 2
      %s222 = scalar_lea.vmem %s0, %s221
      %p223 = pneg %p38
      %p224 = pneg %p35
      %p225 = pneg %p59
      %p226 = pneg %p56
      %p227 = pneg %p80
      %p228 = pneg %p77
      %p229 = pneg %p101
      %p230 = pneg %p98
      %p231 = pneg %p122
      %p232 = pneg %p119
      %p233 = pneg %p143
      %p234 = pneg %p140
      %p235 = pneg %p169
      %p236 = pneg %p166
      %p237 = scmp.lt.s32.totalorder %s17, 1
      %s238 = scalar_select %p237, %s17, 1
      %s239 = smul.addr %s238, 2
      %s240 = smul.addr %s239, 8
      %s241 = scalar_lea.vmem %s6, %s240
      %p242 = scmp.lt.s32.totalorder %s17, 1
      %s243 = scalar_select %p242, %s17, 1
      %s244 = smul.addr %s243, 3
      %s245 = smul.addr %s244, 2
      %s246 = scalar_lea.vmem %s0, %s245
      %p247 = scmp.lt.s32.totalorder %s17, 1
      %s248 = scalar_select %p247, %s17, 1
      %s249 = smul.addr %s248, 2
      %s250 = smul.addr %s249, 8
      %s251 = scalar_lea.vmem %s6, %s250
      %v253 = vld [vmem:[%s246] sm:$0x3f]
      %v254 = vunpack.c.l.bf16 %v253
      %v255 = vunpack.c.h.bf16 %v253
      %258 = vst [vmem:[#allocation1] ss:$2 sm:$0xff] %v254
      %s259 = scalar_lea.vmem [#allocation1], 16
      %260 = vst [vmem:[%s259] ss:$2 sm:$0xff] %v255
      %v261 = vld.sshfl [vmem:[#allocation1] sm:$0xff pattern:$0x75316420]
      %v262 = vld.sshfl [vmem:[#allocation1 + $0x8] sm:$0xff pattern:$0x75316420]
      %v263 = vld.sshfl [vmem:[#allocation1 + $0x10] sm:$0xff pattern:$0x75316420]
      %267 = vrot.lane.b32.xlu0 %v261, 37
      %v268 = vpop.permute.xlu0 %267
      %269 = vrot.lane.b32.xlu0 %v262, 37
      %v270 = vpop.permute.xlu0 %269
      %271 = vrot.lane.b32.xlu0 %v263, 37
      %v272 = vpop.permute.xlu0 %271
      %v273 = vlaneseq
      %v274 = vand.u32 %v273, 127
      %vm275 = vcmp.lt.s32.totalorder %v274, 37
      %v276 = vsel %vm275, %v270, %v272
      %v277 = vsel %vm275, %v268, %v270
      %v278 = vsel %vm275, %v272, %v268
      %279 = vst [vmem:[#allocation2] sm:$0xf] %v278
      %280 = vst [vmem:[#allocation2 + $0x8] sm:$0xf] %v277
      %281 = vst [vmem:[#allocation2 + $0x10] sm:$0xf] %v276
      %282 = vst [vmem:[#allocation1] ss:$2 sm:$0xff] %v254
      %s283 = scalar_lea.vmem [#allocation1], 16
      %284 = vst [vmem:[%s283] ss:$2 sm:$0xff] %v255
      %v285 = vld.sshfl [vmem:[#allocation1] sm:$0xff pattern:$0x75316420]
      %v286 = vld.sshfl [vmem:[#allocation1 + $0x8] sm:$0xff pattern:$0x75316420]
      %v287 = vld.sshfl [vmem:[#allocation1 + $0x10] sm:$0xff pattern:$0x75316420]
      %291 = vrot.lane.b32.xlu0 %v285, 36
      %v292 = vpop.permute.xlu0 %291
      %293 = vrot.lane.b32.xlu0 %v286, 36
      %v294 = vpop.permute.xlu0 %293
      %295 = vrot.lane.b32.xlu0 %v287, 36
      %v296 = vpop.permute.xlu0 %295
      %vm297 = vcmp.lt.s32.totalorder %v274, 36
      %v298 = vsel %vm297, %v294, %v296
      %v299 = vsel %vm297, %v292, %v294
      %v300 = vsel %vm297, %v296, %v292
      %v304 = vrot.slane %v300, 4
      %v305 = vrot.slane %v299, 4
      %v306 = vrot.slane %v298, 4
      %310 = vst [vmem:[#allocation2] sm:$0xf0] %v304
      %311 = vst [vmem:[#allocation2 + $0x8] sm:$0xf0] %v305
      %312 = vst [vmem:[#allocation2 + $0x10] sm:$0xf0] %v306
      %313 = vst [vmem:[#allocation1] ss:$2 sm:$0xff] %v254
      %s314 = scalar_lea.vmem [#allocation1], 16
      %315 = vst [vmem:[%s314] ss:$2 sm:$0xff] %v255
      %v316 = vld.sshfl [vmem:[#allocation1] sm:$0xff pattern:$0x75316420]
      %v317 = vld.sshfl [vmem:[#allocation1 + $0x8] sm:$0xff pattern:$0x75316420]
      %v318 = vld.sshfl [vmem:[#allocation1 + $0x10] sm:$0xff pattern:$0x75316420]
      %322 = vrot.lane.b32.xlu0 %v316, 35
      %v323 = vpop.permute.xlu0 %322
      %324 = vrot.lane.b32.xlu0 %v317, 35
      %v325 = vpop.permute.xlu0 %324
      %326 = vrot.lane.b32.xlu0 %v318, 35
      %v327 = vpop.permute.xlu0 %326
      %vm328 = vcmp.lt.s32.totalorder %v274, 35
      %v329 = vsel %vm328, %v325, %v327
      %v330 = vsel %vm328, %v323, %v325
      %v331 = vsel %vm328, %v327, %v323
      %332 = vst [vmem:[#allocation2 + $0x18] sm:$0xf] %v331
      %333 = vst [vmem:[#allocation2 + $0x20] sm:$0xf] %v330
      %334 = vst [vmem:[#allocation2 + $0x28] sm:$0xf] %v329
      %335 = vst [vmem:[#allocation1] ss:$2 sm:$0xff] %v254
      %s336 = scalar_lea.vmem [#allocation1], 16
      %337 = vst [vmem:[%s336] ss:$2 sm:$0xff] %v255
      %v338 = vld.sshfl [vmem:[#allocation1] sm:$0xff pattern:$0x75316420]
      %v339 = vld.sshfl [vmem:[#allocation1 + $0x8] sm:$0xff pattern:$0x75316420]
      %v340 = vld.sshfl [vmem:[#allocation1 + $0x10] sm:$0xff pattern:$0x75316420]
      %344 = vrot.lane.b32.xlu0 %v338, 19
      %v345 = vpop.permute.xlu0 %344
      %346 = vrot.lane.b32.xlu0 %v339, 19
      %v347 = vpop.permute.xlu0 %346
      %348 = vrot.lane.b32.xlu0 %v340, 19
      %v349 = vpop.permute.xlu0 %348
      %vm350 = vcmp.lt.s32.totalorder %v274, 19
      %v351 = vsel %vm350, %v347, %v349
      %v352 = vsel %vm350, %v345, %v347
      %v353 = vsel %vm350, %v349, %v345
      %v357 = vrot.slane %v353, 4
      %v358 = vrot.slane %v352, 4
      %v359 = vrot.slane %v351, 4
      %363 = vst [vmem:[#allocation2 + $0x18] sm:$0xf0] %v357
      %364 = vst [vmem:[#allocation2 + $0x20] sm:$0xf0] %v358
      %365 = vst [vmem:[#allocation2 + $0x28] sm:$0xf0] %v359
      %366 = vst [vmem:[#allocation1] ss:$2 sm:$0xff] %v254
      %s367 = scalar_lea.vmem [#allocation1], 16
      %368 = vst [vmem:[%s367] ss:$2 sm:$0xff] %v255
      %v369 = vld.sshfl [vmem:[#allocation1] sm:$0xff pattern:$0x75316420]
      %v370 = vld.sshfl [vmem:[#allocation1 + $0x8] sm:$0xff pattern:$0x75316420]
      %v371 = vld.sshfl [vmem:[#allocation1 + $0x10] sm:$0xff pattern:$0x75316420]
      %375 = vrot.lane.b32.xlu0 %v369, 18
      %v376 = vpop.permute.xlu0 %375
      %377 = vrot.lane.b32.xlu0 %v370, 18
      %v378 = vpop.permute.xlu0 %377
      %379 = vrot.lane.b32.xlu0 %v371, 18
      %v380 = vpop.permute.xlu0 %379
      %vm381 = vcmp.lt.s32.totalorder %v274, 18
      %v382 = vsel %vm381, %v378, %v380
      %v383 = vsel %vm381, %v376, %v378
      %v384 = vsel %vm381, %v380, %v376
      %385 = vst [vmem:[#allocation2 + $0x30] sm:$0xf] %v384
      %386 = vst [vmem:[#allocation2 + $0x38] sm:$0xf] %v383
      %387 = vst [vmem:[#allocation2 + $0x40] sm:$0xf] %v382
      %388 = vst [vmem:[#allocation1] ss:$2 sm:$0xff] %v254
      %s389 = scalar_lea.vmem [#allocation1], 16
      %390 = vst [vmem:[%s389] ss:$2 sm:$0xff] %v255
      %v391 = vld.sshfl [vmem:[#allocation1] sm:$0xff pattern:$0x75316420]
      %v392 = vld.sshfl [vmem:[#allocation1 + $0x8] sm:$0xff pattern:$0x75316420]
      %v393 = vld.sshfl [vmem:[#allocation1 + $0x10] sm:$0xff pattern:$0x75316420]
      %397 = vrot.lane.b32.xlu0 %v391, 17
      %v398 = vpop.permute.xlu0 %397
      %399 = vrot.lane.b32.xlu0 %v392, 17
      %v400 = vpop.permute.xlu0 %399
      %401 = vrot.lane.b32.xlu0 %v393, 17
      %v402 = vpop.permute.xlu0 %401
      %vm403 = vcmp.lt.s32.totalorder %v274, 17
      %v404 = vsel %vm403, %v400, %v402
      %v405 = vsel %vm403, %v398, %v400
      %v406 = vsel %vm403, %v402, %v398
      %v410 = vrot.slane %v406, 4
      %v411 = vrot.slane %v405, 4
      %v412 = vrot.slane %v404, 4
      %416 = vst [vmem:[#allocation2 + $0x30] sm:$0xf0] %v410
      %417 = vst [vmem:[#allocation2 + $0x38] sm:$0xf0] %v411
      %418 = vst [vmem:[#allocation2 + $0x40] sm:$0xf0] %v412
      %419 = vst [vmem:[#allocation1] ss:$2 sm:$0xff] %v254
      %s420 = scalar_lea.vmem [#allocation1], 16
      %421 = vst [vmem:[%s420] ss:$2 sm:$0xff] %v255
      %v422 = vld.sshfl [vmem:[#allocation1] sm:$0xff pattern:$0x75316420]
      %v423 = vld.sshfl [vmem:[#allocation1 + $0x8] sm:$0xff pattern:$0x75316420]
      %v424 = vld.sshfl [vmem:[#allocation1 + $0x10] sm:$0xff pattern:$0x75316420]
      %428 = vrot.lane.b32.xlu0 %v422, 1
      %v429 = vpop.permute.xlu0 %428
      %430 = vrot.lane.b32.xlu0 %v423, 1
      %v431 = vpop.permute.xlu0 %430
      %432 = vrot.lane.b32.xlu0 %v424, 1
      %v433 = vpop.permute.xlu0 %432
      %vm434 = vcmp.lt.s32.totalorder %v274, 1
      %v435 = vsel %vm434, %v431, %v433
      %v436 = vsel %vm434, %v429, %v431
      %v437 = vsel %vm434, %v433, %v429
      %438 = vst [vmem:[#allocation2 + $0x48] sm:$0xf] %v437
      %439 = vst [vmem:[#allocation2 + $0x50] sm:$0xf] %v436
      %440 = vst [vmem:[#allocation2 + $0x58] sm:$0xf] %v435
      %s441 = scalar_lea.vmem [#allocation1], 1
      %442 = vst [vmem:[%s441] ss:$2 sm:$0xff] %v254
      %s443 = scalar_lea.vmem [#allocation1], 17
      %444 = vst [vmem:[%s443] ss:$2 sm:$0xff] %v255
      %v445 = vld.sshfl [vmem:[#allocation1] sm:$0xff pattern:$0x75316420]
      %v446 = vld.sshfl [vmem:[#allocation1 + $0x8] sm:$0xff pattern:$0x75316420]
      %v447 = vld.sshfl [vmem:[#allocation1 + $0x10] sm:$0xff pattern:$0x75316420]
      %451 = vst [vmem:[#allocation2 + $0x48] sm:$0xf0] %v445
      %452 = vst [vmem:[#allocation2 + $0x50] sm:$0xf0] %v446
      %453 = vst [vmem:[#allocation2 + $0x58] sm:$0xf0] %v447
      %454 = vst [vmem:[#allocation1] ss:$2 sm:$0xff] %v254
      %s455 = scalar_lea.vmem [#allocation1], 16
      %456 = vst [vmem:[%s455] ss:$2 sm:$0xff] %v255
      %v457 = vld.sshfl [vmem:[#allocation1] sm:$0xff pattern:$0x75316420]
      %v458 = vld.sshfl [vmem:[#allocation1 + $0x8] sm:$0xff pattern:$0x75316420]
      %v459 = vld.sshfl [vmem:[#allocation1 + $0x10] sm:$0xff pattern:$0x75316420]
      %463 = vrot.lane.b32.xlu0 %v457, 127
      %v464 = vpop.permute.xlu0 %463
      %465 = vrot.lane.b32.xlu0 %v458, 127
      %v466 = vpop.permute.xlu0 %465
      %467 = vrot.lane.b32.xlu0 %v459, 127
      %v468 = vpop.permute.xlu0 %467
      %vm469 = vcmp.lt.s32.totalorder %v274, 127
      %v470 = vsel %vm469, %v466, %v468
      %v471 = vsel %vm469, %v464, %v466
      %v472 = vsel %vm469, %v468, %v464
      %473 = vst [vmem:[#allocation2 + $0x60] sm:$0xf] %v471
      %474 = vst [vmem:[#allocation2 + $0x68] sm:$0xf] %v470
      %475 = vst [vmem:[#allocation2 + $0x70] sm:$0xf] %v472
      %v476 = vld [vmem:[%s1] sm:$0xf]
      %v477 = vld [vmem:[#allocation2] sm:$0xff]
      %v478 = vld [vmem:[#allocation2 + $0x8] sm:$0xff]
      %v479 = vld [vmem:[#allocation2 + $0x10] sm:$0xff]
      %v480 = vld [vmem:[#allocation2 + $0x18] sm:$0xff]
      %v481 = vld [vmem:[#allocation2 + $0x20] sm:$0xff]
      %v482 = vld [vmem:[#allocation2 + $0x28] sm:$0xff]
      %v483 = vld [vmem:[#allocation2 + $0x30] sm:$0xff]
      %v484 = vld [vmem:[#allocation2 + $0x38] sm:$0xff]
      %v485 = vld [vmem:[#allocation2 + $0x40] sm:$0xff]
      %v486 = vld [vmem:[#allocation2 + $0x48] sm:$0xff]
      %v487 = vld [vmem:[#allocation2 + $0x50] sm:$0xff]
      %v488 = vld [vmem:[#allocation2 + $0x58] sm:$0xff]
      %v489 = vld [vmem:[#allocation2 + $0x60] sm:$0xf]
      %v490 = vld [vmem:[#allocation2 + $0x68] sm:$0xf]
      %v491 = vld [vmem:[#allocation2 + $0x70] sm:$0xf]
      %v492 = vpack.c.bf16 %v480, %v477
      %v493 = vpack.c.bf16 %v481, %v478
      %v494 = vpack.c.bf16 %v482, %v479
      %v495 = vpack.c.bf16 %v486, %v483
      %v496 = vpack.c.bf16 %v487, %v484
      %v497 = vpack.c.bf16 %v488, %v485
      %v498 = vpack.c.bf16 %v489, %v489
      %v499 = vpack.c.bf16 %v490, %v490
      %v500 = vpack.c.bf16 %v491, %v491
      %v501 = vld [vmem:[%s2] sm:$0xff]
      %503 = vset.pattern.permute.xlu0 0
      %504 = vperm.xlu0 %503, %v501
      %v505 = vpop.permute.xlu0 %504
      %vm507 = vcmask 293888
      %v509 = vsel %vm507, %v476, 0
      %vm511 = vcmask 1041408
      %v513 = vsel %vm511, %v498, 0
      %v516 = vsel %vm511, %v499, 0
      %v519 = vsel %vm511, %v500, 0
      %521 = vmatpush.bf16.msra.mxu0 0
      %522 = vmatpush.bf16.msra.mxu0 0
      %523 = vmatpush.bf16.msra.mxu0 0
      %524 = vmatpush.bf16.msra.mxu0 0
      %525 = vmatpush.bf16.msra.mxu0 0
      %526 = vmatpush.bf16.msra.mxu0 %v513
      %527 = vmatpush.bf16.msra.mxu0 %v495
      %528 = vmatpush.bf16.msra.mxu0 %v492
      %529 = vmatmul.bf16.gmra.mxu0 %v509
      %v530 = vpop.f32.mrf.mxu0
      %v531 = vadd.f32 %v505, %v530
      %v532 = vpop.f32.mrf.mxu0
      %533 = vdwg.mxu0
      %534 = vmatpush.bf16.msra.mxu0 0
      %535 = vmatpush.bf16.msra.mxu0 0
      %536 = vmatpush.bf16.msra.mxu0 0
      %537 = vmatpush.bf16.msra.mxu0 0
      %538 = vmatpush.bf16.msra.mxu0 0
      %539 = vmatpush.bf16.msra.mxu0 %v516
      %540 = vmatpush.bf16.msra.mxu0 %v496
      %541 = vmatpush.bf16.msra.mxu0 %v493
      %542 = vmatmul.bf16.gmra.mxu0 %v509
      %v543 = vpop.f32.mrf.mxu0
      %v544 = vadd.f32 %v505, %v543
      %v545 = vpop.f32.mrf.mxu0
      %546 = vdwg.mxu0
      %547 = vmatpush.bf16.msra.mxu0 0
      %548 = vmatpush.bf16.msra.mxu0 0
      %549 = vmatpush.bf16.msra.mxu0 0
      %550 = vmatpush.bf16.msra.mxu0 0
      %551 = vmatpush.bf16.msra.mxu0 0
      %552 = vmatpush.bf16.msra.mxu0 %v519
      %553 = vmatpush.bf16.msra.mxu0 %v497
      %554 = vmatpush.bf16.msra.mxu0 %v494
      %555 = vmatmul.bf16.gmra.mxu0 %v509
      %v556 = vpop.f32.mrf.mxu0
      %v557 = vadd.f32 %v505, %v556
      %v558 = vpop.f32.mrf.mxu0
      %559 = vdwg.mxu0
      %vm560 = vcmp.gt.f32.partialorder %v531, 0.0
      %vm561 = vcmp.gt.f32.partialorder %v544, 0.0
      %vm562 = vcmp.gt.f32.partialorder %v557, 0.0
      %v563 = vmul.f32 %v531, 0.2
      %v564 = vmul.f32 %v544, 0.2
      %v565 = vmul.f32 %v557, 0.2
      %v566 = vsel %vm560, %v531, %v563
      %v567 = vsel %vm561, %v544, %v564
      %v568 = vsel %vm562, %v557, %v565
      %v569 = vmul.f32 %v566, %v566
      %v570 = vmul.f32 %v567, %v567
      %v571 = vmul.f32 %v568, %v568
      %v572 = vrot.slane %v569, 4
      %v573 = vadd.f32 %v569, %v572
      %v574 = vrot.slane %v573, 2
      %v575 = vadd.f32 %v573, %v574
      %v576 = vrot.slane %v575, 1
      %v577 = vadd.f32 %v575, %v576
      %v578 = vrot.slane %v570, 4
      %v579 = vadd.f32 %v570, %v578
      %v580 = vrot.slane %v579, 2
      %v581 = vadd.f32 %v579, %v580
      %v582 = vrot.slane %v581, 1
      %v583 = vadd.f32 %v581, %v582
      %v584 = vrot.slane %v571, 4
      %v585 = vadd.f32 %v571, %v584
      %v586 = vrot.slane %v585, 2
      %v587 = vadd.f32 %v585, %v586
      %v588 = vrot.slane %v587, 1
      %v589 = vadd.f32 %v587, %v588
      %v590 = vrcp.pop 8.0
      %v591 = vmul.f32 8.0, %v590
      %v592 = vsub.f32 1.0, %v591
      %v593 = vmul.f32 %v590, %v592
      %v594 = vadd.f32 %v590, %v593
      %vm595 = vweird.f32 %v590
      %v596 = vsel %vm595, %v590, %v594
      %v597 = vmul.f32 %v577, %v596
      %v598 = vmul.f32 %v583, %v596
      %v599 = vmul.f32 %v589, %v596
      %v600 = vadd.f32 %v597, 1e-08
      %v601 = vadd.f32 %v598, 1e-08
      %v602 = vadd.f32 %v599, 1e-08
      %v603 = vrsqrt.pop %v600
      %v604 = vmul.f32 %v603, %v600
      %v605 = vmul.f32 %v604, %v603
      %v606 = vmul.f32 0.5, %v605
      %v607 = vsub.f32 1.5, %v606
      %v608 = vmul.f32 %v603, %v607
      %vm609 = vweird.f32 %v600
      %vm610 = vweird.f32 %v603
      %vm611 = vmor %vm609, %vm610
      %v612 = vsel %vm611, %v603, %v608
      %v613 = vrsqrt.pop %v601
      %v614 = vmul.f32 %v613, %v601
      %v615 = vmul.f32 %v614, %v613
      %v616 = vmul.f32 0.5, %v615
      %v617 = vsub.f32 1.5, %v616
      %v618 = vmul.f32 %v613, %v617
      %vm619 = vweird.f32 %v601
      %vm620 = vweird.f32 %v613
      %vm621 = vmor %vm619, %vm620
      %v622 = vsel %vm621, %v613, %v618
      %v623 = vrsqrt.pop %v602
      %v624 = vmul.f32 %v623, %v602
      %v625 = vmul.f32 %v624, %v623
      %v626 = vmul.f32 0.5, %v625
      %v627 = vsub.f32 1.5, %v626
      %v628 = vmul.f32 %v623, %v627
      %vm629 = vweird.f32 %v602
      %vm630 = vweird.f32 %v623
      %vm631 = vmor %vm629, %vm630
      %v632 = vsel %vm631, %v623, %v628
      %v633 = vmul.f32 %v566, %v612
      %v634 = vmul.f32 %v567, %v622
      %v635 = vmul.f32 %v568, %v632
      %v636 = vld [vmem:[%s5] sm:$0x7]
      %v638 = vperm.slane %v636, 0
      %v639 = vperm.slane %v636, 1
      %v640 = vperm.slane %v636, 2
      %v644 = vmul.f32 %v633, %v638
      %v645 = vmul.f32 %v634, %v639
      %v646 = vmul.f32 %v635, %v640
      %647 = vrot.lane.b32.xlu0 %v644, 19
      %v648 = vpop.permute.xlu0 %647
      %649 = vrot.lane.b32.xlu0 %v645, 19
      %v650 = vpop.permute.xlu0 %649
      %651 = vrot.lane.b32.xlu0 %v646, 19
      %v652 = vpop.permute.xlu0 %651
      %v653 = vsel %vm350, %v650, %v652
      %v654 = vsel %vm350, %v648, %v650
      %v655 = vsel %vm350, %v652, %v648
      %656 = vst [vmem:[#allocation3] sm:$0xff] %v655
      %657 = vst [vmem:[#allocation3 + $0x8] sm:$0xff] %v654
      %658 = vst [vmem:[#allocation3 + $0x10] sm:$0xff] %v653
      %659 = vrot.lane.b32.xlu0 %v644, 18
      %v660 = vpop.permute.xlu0 %659
      %661 = vrot.lane.b32.xlu0 %v645, 18
      %v662 = vpop.permute.xlu0 %661
      %663 = vrot.lane.b32.xlu0 %v646, 18
      %v664 = vpop.permute.xlu0 %663
      %v665 = vsel %vm381, %v662, %v664
      %v666 = vsel %vm381, %v660, %v662
      %v667 = vsel %vm381, %v664, %v660
      %668 = vst [vmem:[#allocation3 + $0x18] sm:$0xff] %v667
      %669 = vst [vmem:[#allocation3 + $0x20] sm:$0xff] %v666
      %670 = vst [vmem:[#allocation3 + $0x28] sm:$0xff] %v665
      %671 = vrot.lane.b32.xlu0 %v644, 17
      %v672 = vpop.permute.xlu0 %671
      %673 = vrot.lane.b32.xlu0 %v645, 17
      %v674 = vpop.permute.xlu0 %673
      %675 = vrot.lane.b32.xlu0 %v646, 17
      %v676 = vpop.permute.xlu0 %675
      %v677 = vsel %vm403, %v674, %v676
      %v678 = vsel %vm403, %v672, %v674
      %v679 = vsel %vm403, %v676, %v672
      %680 = vst [vmem:[#allocation3 + $0x30] sm:$0xff] %v679
      %681 = vst [vmem:[#allocation3 + $0x38] sm:$0xff] %v678
      %682 = vst [vmem:[#allocation3 + $0x40] sm:$0xff] %v677
      %683 = vrot.lane.b32.xlu0 %v644, 1
      %v684 = vpop.permute.xlu0 %683
      %685 = vrot.lane.b32.xlu0 %v645, 1
      %v686 = vpop.permute.xlu0 %685
      %687 = vrot.lane.b32.xlu0 %v646, 1
      %v688 = vpop.permute.xlu0 %687
      %v689 = vsel %vm434, %v686, %v688
      %v690 = vsel %vm434, %v684, %v686
      %v691 = vsel %vm434, %v688, %v684
      %692 = vst [vmem:[#allocation3 + $0x48] sm:$0xff] %v691
      %693 = vst [vmem:[#allocation3 + $0x50] sm:$0xff] %v690
      %694 = vst [vmem:[#allocation3 + $0x58] sm:$0xff] %v689
      %695 = vst [vmem:[#allocation3 + $0x60] sm:$0xff] %v644
      %696 = vst [vmem:[#allocation3 + $0x68] sm:$0xff] %v645
      %697 = vst [vmem:[#allocation3 + $0x70] sm:$0xff] %v646
      %698 = vrot.lane.b32.xlu0 %v644, 127
      %v699 = vpop.permute.xlu0 %698
      %700 = vrot.lane.b32.xlu0 %v645, 127
      %v701 = vpop.permute.xlu0 %700
      %702 = vrot.lane.b32.xlu0 %v646, 127
      %v703 = vpop.permute.xlu0 %702
      %v704 = vsel %vm469, %v701, %v703
      %v705 = vsel %vm469, %v699, %v701
      %v706 = vsel %vm469, %v703, %v699
      %707 = vst [vmem:[#allocation3 + $0x78] sm:$0xff] %v705
      %708 = vst [vmem:[#allocation3 + $0x80] sm:$0xff] %v704
      %709 = vst [vmem:[#allocation3 + $0x88] sm:$0xff] %v706
      %710 = vrot.lane.b32.xlu0 %v644, 111
      %v711 = vpop.permute.xlu0 %710
      %712 = vrot.lane.b32.xlu0 %v645, 111
      %v713 = vpop.permute.xlu0 %712
      %714 = vrot.lane.b32.xlu0 %v646, 111
      %v715 = vpop.permute.xlu0 %714
      %vm716 = vcmp.lt.s32.totalorder %v274, 111
      %v717 = vsel %vm716, %v713, %v715
      %v718 = vsel %vm716, %v711, %v713
      %v719 = vsel %vm716, %v715, %v711
      %720 = vst [vmem:[#allocation3 + $0x90] sm:$0xff] %v718
      %721 = vst [vmem:[#allocation3 + $0x98] sm:$0xff] %v717
      %722 = vst [vmem:[#allocation3 + $0xa0] sm:$0xff] %v719
      %723 = vrot.lane.b32.xlu0 %v644, 110
      %v724 = vpop.permute.xlu0 %723
      %725 = vrot.lane.b32.xlu0 %v645, 110
      %v726 = vpop.permute.xlu0 %725
      %727 = vrot.lane.b32.xlu0 %v646, 110
      %v728 = vpop.permute.xlu0 %727
      %vm729 = vcmp.lt.s32.totalorder %v274, 110
      %v730 = vsel %vm729, %v726, %v728
      %v731 = vsel %vm729, %v724, %v726
      %v732 = vsel %vm729, %v728, %v724
      %733 = vst [vmem:[#allocation3 + $0xa8] sm:$0xff] %v731
      %734 = vst [vmem:[#allocation3 + $0xb0] sm:$0xff] %v730
      %735 = vst [vmem:[#allocation3 + $0xb8] sm:$0xff] %v732
      %736 = vrot.lane.b32.xlu0 %v644, 109
      %v737 = vpop.permute.xlu0 %736
      %738 = vrot.lane.b32.xlu0 %v645, 109
      %v739 = vpop.permute.xlu0 %738
      %740 = vrot.lane.b32.xlu0 %v646, 109
      %v741 = vpop.permute.xlu0 %740
      %vm742 = vcmp.lt.s32.totalorder %v274, 109
      %v743 = vsel %vm742, %v739, %v741
      %v744 = vsel %vm742, %v737, %v739
      %v745 = vsel %vm742, %v741, %v737
      %746 = vst [vmem:[#allocation3 + $0xc0] sm:$0xff] %v744
      %747 = vst [vmem:[#allocation3 + $0xc8] sm:$0xff] %v743
      %748 = vst [vmem:[#allocation3 + $0xd0] sm:$0xff] %v745
      %v749 = vld [vmem:[%s3] sm:$0xf]
      %v750 = vld [vmem:[#allocation3] sm:$0xff]
      %v751 = vld [vmem:[#allocation3 + $0x8] sm:$0xff]
      %v752 = vld [vmem:[#allocation3 + $0x10] sm:$0xff]
      %v753 = vld [vmem:[#allocation3 + $0x18] sm:$0xff]
      %v754 = vld [vmem:[#allocation3 + $0x20] sm:$0xff]
      %v755 = vld [vmem:[#allocation3 + $0x28] sm:$0xff]
      %v756 = vld [vmem:[#allocation3 + $0x30] sm:$0xff]
      %v757 = vld [vmem:[#allocation3 + $0x38] sm:$0xff]
      %v758 = vld [vmem:[#allocation3 + $0x40] sm:$0xff]
      %v759 = vld [vmem:[#allocation3 + $0x48] sm:$0xff]
      %v760 = vld [vmem:[#allocation3 + $0x50] sm:$0xff]
      %v761 = vld [vmem:[#allocation3 + $0x58] sm:$0xff]
      %v762 = vld [vmem:[#allocation3 + $0x60] sm:$0xff]
      %v763 = vld [vmem:[#allocation3 + $0x68] sm:$0xff]
      %v764 = vld [vmem:[#allocation3 + $0x70] sm:$0xff]
      %v765 = vld [vmem:[#allocation3 + $0x78] sm:$0xff]
      %v766 = vld [vmem:[#allocation3 + $0x80] sm:$0xff]
      %v767 = vld [vmem:[#allocation3 + $0x88] sm:$0xff]
      %v768 = vld [vmem:[#allocation3 + $0x90] sm:$0xff]
      %v769 = vld [vmem:[#allocation3 + $0x98] sm:$0xff]
      %v770 = vld [vmem:[#allocation3 + $0xa0] sm:$0xff]
      %v771 = vld [vmem:[#allocation3 + $0xa8] sm:$0xff]
      %v772 = vld [vmem:[#allocation3 + $0xb0] sm:$0xff]
      %v773 = vld [vmem:[#allocation3 + $0xb8] sm:$0xff]
      %v774 = vld [vmem:[#allocation3 + $0xc0] sm:$0xff]
      %v775 = vld [vmem:[#allocation3 + $0xc8] sm:$0xff]
      %v776 = vld [vmem:[#allocation3 + $0xd0] sm:$0xff]
      %v777 = vpack.c.bf16 %v753, %v750
      %v778 = vpack.c.bf16 %v754, %v751
      %v779 = vpack.c.bf16 %v755, %v752
      %v780 = vpack.c.bf16 %v759, %v756
      %v781 = vpack.c.bf16 %v760, %v757
      %v782 = vpack.c.bf16 %v761, %v758
      %v783 = vpack.c.bf16 %v765, %v762
      %v784 = vpack.c.bf16 %v766, %v763
      %v785 = vpack.c.bf16 %v767, %v764
      %v786 = vpack.c.bf16 %v771, %v768
      %v787 = vpack.c.bf16 %v772, %v769
      %v788 = vpack.c.bf16 %v773, %v770
      %v789 = vpack.c.bf16 %v774, %v774
      %v790 = vpack.c.bf16 %v775, %v775
      %v791 = vpack.c.bf16 %v776, %v776
      %v792 = vld [vmem:[%s4] sm:$0xff]
      %794 = vset.pattern.permute.xlu0 0
      %795 = vperm.xlu0 %794, %v792
      %v796 = vpop.permute.xlu0 %795
      %vm798 = vcmask 588800
      %v800 = vsel %vm798, %v749, 0
      %vm802 = vcmask 1043456
      %v804 = vsel %vm802, %v789, 0
      %v807 = vsel %vm802, %v790, 0
      %v810 = vsel %vm802, %v791, 0
      %812 = vmatpush.bf16.msra.mxu0 0
      %813 = vmatpush.bf16.msra.mxu0 0
      %814 = vmatpush.bf16.msra.mxu0 0
      %815 = vmatpush.bf16.msra.mxu0 %v804
      %816 = vmatpush.bf16.msra.mxu0 %v786
      %817 = vmatpush.bf16.msra.mxu0 %v783
      %818 = vmatpush.bf16.msra.mxu0 %v780
      %819 = vmatpush.bf16.msra.mxu0 %v777
      %820 = vmatmul.bf16.gmra.mxu0 %v800
      %v821 = vpop.f32.mrf.mxu0
      %v822 = vadd.f32 %v796, %v821
      %v823 = vpop.f32.mrf.mxu0
      %824 = vdwg.mxu0
      %825 = vmatpush.bf16.msra.mxu0 0
      %826 = vmatpush.bf16.msra.mxu0 0
      %827 = vmatpush.bf16.msra.mxu0 0
      %828 = vmatpush.bf16.msra.mxu0 %v807
      %829 = vmatpush.bf16.msra.mxu0 %v787
      %830 = vmatpush.bf16.msra.mxu0 %v784
      %831 = vmatpush.bf16.msra.mxu0 %v781
      %832 = vmatpush.bf16.msra.mxu0 %v778
      %833 = vmatmul.bf16.gmra.mxu0 %v800
      %v834 = vpop.f32.mrf.mxu0
      %v835 = vadd.f32 %v796, %v834
      %v836 = vpop.f32.mrf.mxu0
      %837 = vdwg.mxu0
      %838 = vmatpush.bf16.msra.mxu0 0
      %839 = vmatpush.bf16.msra.mxu0 0
      %840 = vmatpush.bf16.msra.mxu0 0
      %841 = vmatpush.bf16.msra.mxu0 %v810
      %842 = vmatpush.bf16.msra.mxu0 %v788
      %843 = vmatpush.bf16.msra.mxu0 %v785
      %844 = vmatpush.bf16.msra.mxu0 %v782
      %845 = vmatpush.bf16.msra.mxu0 %v779
      %846 = vmatmul.bf16.gmra.mxu0 %v800
      %v847 = vpop.f32.mrf.mxu0
      %v848 = vadd.f32 %v796, %v847
      %v849 = vpop.f32.mrf.mxu0
      %850 = vdwg.mxu0
      %vm851 = vcmp.gt.f32.partialorder %v822, 0.0
      %vm852 = vcmp.gt.f32.partialorder %v835, 0.0
      %vm853 = vcmp.gt.f32.partialorder %v848, 0.0
      %v854 = vmul.f32 %v822, 0.2
      %v855 = vmul.f32 %v835, 0.2
      %v856 = vmul.f32 %v848, 0.2
      %v857 = vsel %vm851, %v822, %v854
      %v858 = vsel %vm852, %v835, %v855
      %v859 = vsel %vm853, %v848, %v856
      %v860 = vmul.f32 %v857, %v857
      %v861 = vmul.f32 %v858, %v858
      %v862 = vmul.f32 %v859, %v859
      %v863 = vrot.slane %v860, 4
      %v864 = vadd.f32 %v860, %v863
      %v865 = vrot.slane %v864, 2
      %v866 = vadd.f32 %v864, %v865
      %v867 = vrot.slane %v866, 1
      %v868 = vadd.f32 %v866, %v867
      %v869 = vrot.slane %v861, 4
      %v870 = vadd.f32 %v861, %v869
      %v871 = vrot.slane %v870, 2
      %v872 = vadd.f32 %v870, %v871
      %v873 = vrot.slane %v872, 1
      %v874 = vadd.f32 %v872, %v873
      %v875 = vrot.slane %v862, 4
      %v876 = vadd.f32 %v862, %v875
      %v877 = vrot.slane %v876, 2
      %v878 = vadd.f32 %v876, %v877
      %v879 = vrot.slane %v878, 1
      %v880 = vadd.f32 %v878, %v879
      %v881 = vmul.f32 %v868, %v596
      %v882 = vmul.f32 %v874, %v596
      %v883 = vmul.f32 %v880, %v596
      %v884 = vadd.f32 %v881, 1e-08
      %v885 = vadd.f32 %v882, 1e-08
      %v886 = vadd.f32 %v883, 1e-08
      %v887 = vrsqrt.pop %v884
      %v888 = vmul.f32 %v887, %v884
      %v889 = vmul.f32 %v888, %v887
      %v890 = vmul.f32 0.5, %v889
      %v891 = vsub.f32 1.5, %v890
      %v892 = vmul.f32 %v887, %v891
      %vm893 = vweird.f32 %v884
      %vm894 = vweird.f32 %v887
      %vm895 = vmor %vm893, %vm894
      %v896 = vsel %vm895, %v887, %v892
      %v897 = vrsqrt.pop %v885
      %v898 = vmul.f32 %v897, %v885
      %v899 = vmul.f32 %v898, %v897
      %v900 = vmul.f32 0.5, %v899
      %v901 = vsub.f32 1.5, %v900
      %v902 = vmul.f32 %v897, %v901
      %vm903 = vweird.f32 %v885
      %vm904 = vweird.f32 %v897
      %vm905 = vmor %vm903, %vm904
      %v906 = vsel %vm905, %v897, %v902
      %v907 = vrsqrt.pop %v886
      %v908 = vmul.f32 %v907, %v886
      %v909 = vmul.f32 %v908, %v907
      %v910 = vmul.f32 0.5, %v909
      %v911 = vsub.f32 1.5, %v910
      %v912 = vmul.f32 %v907, %v911
      %vm913 = vweird.f32 %v886
      %vm914 = vweird.f32 %v907
      %vm915 = vmor %vm913, %vm914
      %v916 = vsel %vm915, %v907, %v912
      %v917 = vmul.f32 %v857, %v896
      %v918 = vmul.f32 %v858, %v906
      %v919 = vmul.f32 %v859, %v916
      %921 = vrot.lane.b32.xlu0 %v917, 109
      %v922 = vpop.permute.xlu0 %921
      %vm924 = vcmask 130048
      %925 = vst.msk [vmem:[%s251] sm:$0xff] %vm924, %v922
      %926 = vrot.lane.b32.xlu0 %v917, 107
      %v927 = vpop.permute.xlu0 %926
      %vm929 = vcmask 261248
      %930 = vst.msk [vmem:[%s251] sm:$0xff] %vm929, %v927
      %931 = vrot.lane.b32.xlu0 %v917, 105
      %v932 = vpop.permute.xlu0 %931
      %vm934 = vcmask 392448
      %935 = vst.msk [vmem:[%s251] sm:$0xff] %vm934, %v932
      %936 = vrot.lane.b32.xlu0 %v917, 103
      %v937 = vpop.permute.xlu0 %936
      %vm939 = vcmask 523648
      %940 = vst.msk [vmem:[%s251] sm:$0xff] %vm939, %v937
      %941 = vrot.lane.b32.xlu0 %v917, 101
      %v942 = vpop.permute.xlu0 %941
      %vm944 = vcmask 654848
      %945 = vst.msk [vmem:[%s251] sm:$0xff] %vm944, %v942
      %946 = vrot.lane.b32.xlu0 %v917, 99
      %v947 = vpop.permute.xlu0 %946
      %vm949 = vcmask 786048
      %950 = vst.msk [vmem:[%s251] sm:$0xff] %vm949, %v947
      %952 = vrot.lane.b32.xlu0 %v917, 97
      %v953 = vpop.permute.xlu0 %952
      %954 = vrot.lane.b32.xlu0 %v918, 97
      %v955 = vpop.permute.xlu0 %954
      %vm956 = vcmask 793600
      %v957 = vsel %vm956, %v953, %v955
      %vm959 = vcmask 917248
      %960 = vst.msk [vmem:[%s251] sm:$0xff] %vm959, %v957
      %961 = vrot.lane.b32.xlu0 %v918, 95
      %v962 = vpop.permute.xlu0 %961
      %vm964 = vcmask 1048448
      %965 = vst.msk [vmem:[%s251] sm:$0xff] %vm964, %v962
      %966 = vrot.lane.b32.xlu0 %v918, 93
      %v967 = vpop.permute.xlu0 %966
      %969 = vst.msk [vmem:[%s251 + $0x8] sm:$0xff] %vm924, %v967
      %970 = vrot.lane.b32.xlu0 %v918, 91
      %v971 = vpop.permute.xlu0 %970
      %973 = vst.msk [vmem:[%s251 + $0x8] sm:$0xff] %vm929, %v971
      %974 = vrot.lane.b32.xlu0 %v918, 89
      %v975 = vpop.permute.xlu0 %974
      %977 = vst.msk [vmem:[%s251 + $0x8] sm:$0xff] %vm934, %v975
      %978 = vrot.lane.b32.xlu0 %v918, 87
      %v979 = vpop.permute.xlu0 %978
      %981 = vst.msk [vmem:[%s251 + $0x8] sm:$0xff] %vm939, %v979
      %982 = vrot.lane.b32.xlu0 %v918, 85
      %v983 = vpop.permute.xlu0 %982
      %985 = vst.msk [vmem:[%s251 + $0x8] sm:$0xff] %vm944, %v983
      %987 = vrot.lane.b32.xlu0 %v918, 83
      %v988 = vpop.permute.xlu0 %987
      %989 = vrot.lane.b32.xlu0 %v919, 83
      %v990 = vpop.permute.xlu0 %989
      %vm991 = vcmask 678912
      %v992 = vsel %vm991, %v988, %v990
      %994 = vst.msk [vmem:[%s251 + $0x8] sm:$0xff] %vm949, %v992
      %995 = vrot.lane.b32.xlu0 %v919, 81
      %v996 = vpop.permute.xlu0 %995
      %998 = vst.msk [vmem:[%s251 + $0x8] sm:$0xff] %vm959, %v996
      %999 = vrot.lane.b32.xlu0 %v919, 79
      %v1000 = vpop.permute.xlu0 %999
      %1002 = vst.msk [vmem:[%s251 + $0x8] sm:$0xff] %vm964, %v1000
      %p1003 = scmp.lt.s32.totalorder %s17, 1
      %s1004 = scalar_select %p1003, %s17, 1
      %s1005 = smul.addr %s1004, 2
      %s1006 = smul.addr %s1005, 8
      %s1007 = scalar_lea.vmem %s6, %s1006
      // Predicated region
      $region45: #{_lambda_.1} parent=43 // pred_check
        %p1008 = pneg %p166
      $region46: #{_lambda_.1} parent=43 // pred_check_branch
        %1010 = sbr.rel (%p1008) target = $region48
      $region47: #{_lambda_.1} parent=43 // pred_region
        _
      $region48: #{_lambda_.1} parent=43 // pred_fallthru
        _
    $region44: #{_lambda_.1} parent=5 // pred_fallthru
      _
    %p1011 = scmp.le.s32.totalorder 2, %s12
    // Predicated region
    $region49: #{_lambda_.1} parent=5 // pred_check
      %p1012 = pneg %p1011
    $region50: #{_lambda_.1} parent=5 // pred_check_branch
      %1014 = sbr.rel (%p1012) target = $region52
    $region51: #{_lambda_.1} parent=5 // pred_region
      %s1015 = ssub.s32 %s12, 2
      // Predicated region
      $region53: #{_lambda_.1} parent=51 // pred_check
        %p1016 = pneg %p172
      $region54: #{_lambda_.1} parent=51 // pred_check_branch
        %1018 = sbr.rel (%p1016) target = $region56
      $region55: #{_lambda_.1} parent=51 // pred_region
        %p1019 = scmp.lt.s32.totalorder %s18, 1
        %s1020 = scalar_select %p1019, %s18, 1
        %s1021 = smul.addr %s1020, 2
        %s1022 = smul.addr %s1021, 8
        %s1023 = scalar_lea.vmem %s6, %s1022
      $region56: #{_lambda_.1} parent=51 // pred_fallthru
        _
    $region52: #{_lambda_.1} parent=5 // pred_fallthru
      _
  $region6: #{_lambda_.1} parent=0 // loop_footer
    %s16 = sadd.s32 1, %s12
  $region7: #{_lambda_.1} parent=0 // loop_footer_branch
    %11 = sbr.rel target = $region3
  $region8: #{_lambda_.1} parent=0 // loop_exit
    _

</llo_original>
